<compile_context>
chip_gen: v6e
topology: v6e:2x2x1
jax: 0.10.0
libtpu: 0.0.40
codegen_flags: <defaults>
</compile_context>

<pallas_src>
import jax
import jax.numpy as jnp
import numpy as np
from jax.experimental import pallas as pl
from jax.experimental.pallas import tpu as pltpu

H = 768        # hidden size fixed by nn.Embedding(poly_m, 768) in the module
POLY_M = 8     # self.poly_m


def _round_up(x, m):
    return (x + m - 1) // m * m


# ---------------------------------------------------------------------------
# Pallas kernels
# ---------------------------------------------------------------------------
def _linear_tanh_kernel(x_ref, w_ref, b_ref, o_ref):
    # tanh(x @ w + b): bf16 operands, f32 MXU accumulation, f32 epilogue.
    y = jnp.dot(x_ref[...], w_ref[...], preferred_element_type=jnp.float32)
    o_ref[...] = jnp.tanh(y + b_ref[...])


def linear_tanh(x, w, b, *, tm_cap=256):
    """tanh(x @ w + b) for x:[N,H], w:[H,H], b:[1,H] -> f32 [N,H].

    Rows are tiled (TM <= 256) so the x/out DMA double-buffers against the MXU
    and VMEM stays bounded on v7x (64 MiB physical / 32 MiB default scoped),
    while the weight block stays resident (constant index_map).
    """
    n, h = x.shape
    n_pad = _round_up(n, 16)                       # bf16 sublane packing = 16 rows
    # Aim for >= 2 grid steps (keeps both v7x TensorCores busy) but cap tile rows.
    tm = min(tm_cap, _round_up(max(16, n_pad // 2), 16))
    n_pad = _round_up(n_pad, tm)
    if n_pad != n:
        x = jnp.pad(x, ((0, n_pad - n), (0, 0)))
    xb = x.astype(jnp.bfloat16)
    wb = w.astype(jnp.bfloat16)

    out = pl.pallas_call(
        _linear_tanh_kernel,
        out_shape=jax.ShapeDtypeStruct((n_pad, h), jnp.float32),
        grid=(n_pad // tm,),
        in_specs=[pl.BlockSpec((tm, h), lambda i: (i, 0)),
                  pl.BlockSpec((h, h), lambda i: (0, 0)),
                  pl.BlockSpec((1, h), lambda i: (0, 0))],
        out_specs=pl.BlockSpec((tm, h), lambda i: (i, 0)),
        compiler_params=pltpu.CompilerParams(
            dimension_semantics=("parallel",),
            vmem_limit_bytes=32 * 1024 * 1024),
    )(xb, wb, b)
    return out[:n]


def _dot_attention_kernel(q_ref, kt_ref, v_ref, o_ref):
    q = q_ref[...]                      # [BB, M, H]
    kt = kt_ref[...]                    # [BB, H, L]  (non-transposed RHS for MXU)
    v = v_ref[...]                      # [BB, L, H]
    # scores = q @ k^T  -> [BB, M, L]
    s = jnp.einsum("bmh,bhl->bml", q, kt, preferred_element_type=jnp.float32)
    # numerically stable softmax over the last axis (matches F.softmax(attn, -1));
    # normalization is deferred to after the p@v matmul, reciprocal goes to EUP.
    s_max = jnp.max(s, axis=-1, keepdims=True)
    p = jnp.exp(s - s_max)
    inv = pl.reciprocal(jnp.sum(p, axis=-1, keepdims=True), approx=True)
    out = jnp.einsum("bml,blh->bmh", p, v, preferred_element_type=jnp.float32)
    o_ref[...] = out * inv


def _pick_bb(b, max_bb=8):
    """Batches per grid step: amortize grid overhead, keep >=2 steps when possible."""
    target = min(max_bb, max(1, b // 2))
    for cand in range(target, 0, -1):
        if b % cand == 0:
            return cand
    return 1


def dot_attention(q, k, v):
    """softmax(q @ k^T, -1) @ v  with q:[B,M,H], k,v:[B,L,H] -> [B,M,H]."""
    b, m, h = q.shape
    _, l, _ = k.shape
    kt = jnp.swapaxes(k, 1, 2)          # [B, H, L]: contract RHS on its leading dim
    bb = _pick_bb(b)
    return pl.pallas_call(
        _dot_attention_kernel,
        out_shape=jax.ShapeDtypeStruct((b, m, h), jnp.float32),
        grid=(b // bb,),
        in_specs=[pl.BlockSpec((bb, m, h), lambda i: (i, 0, 0)),
                  pl.BlockSpec((bb, h, l), lambda i: (i, 0, 0)),
                  pl.BlockSpec((bb, l, h), lambda i: (i, 0, 0))],
        out_specs=pl.BlockSpec((bb, m, h), lambda i: (i, 0, 0)),
        compiler_params=pltpu.CompilerParams(
            dimension_semantics=("parallel",),
            vmem_limit_bytes=32 * 1024 * 1024),
    )(q, kt, v)


# ---------------------------------------------------------------------------
# Model glue (plain JAX, fused by XLA under jit)
# ---------------------------------------------------------------------------
def synthetic_encoder(tokens, params):
    """Stand-in for `self.encoder(x, attention_mask=x.ne(1))[0]` -> [B, L, H]."""
    # TODO(synk): the real pretrained transformer encoder has no in-script
    # equivalent; a deterministic embedding + mask-gate + Pallas tanh-linear
    # layer is used instead.
    emb = params["tok_emb"][tokens]                         # [B, L, H] gather (glue)
    mask = (tokens != 1).astype(jnp.float32)[..., None]     # attention_mask = x.ne(1)
    x = emb * mask
    b, l, h = x.shape
    hidden = linear_tanh(x.reshape(b * l, h), params["enc_w"], params["enc_b"])
    return hidden.reshape(b, l, h)


@jax.jit
def co_model_forward(code_inputs, nl_inputs, params):
    """Faithful to CoModel.forward: v1/v2 are the CLS embeddings of nl/code.

    The encoder runs once on the stacked [code; nl] batch (one big Pallas
    matmul launch); both cross_encoder views reuse the two halves.
    """
    bsz = code_inputs.shape[0]
    stacked = jnp.concatenate([code_inputs, nl_inputs], axis=0)         # [2B, L]
    enc = synthetic_encoder(stacked, params)                            # [2B, L, H]
    enc_code, enc_nl = enc[:bsz], enc[bsz:]

    # Poly-code attention path of the module (ctx_out -> embs -> ctx_emb).
    # Its result never reaches the module output, so XLA DCE removes this
    # pallas_call under jit -- traced once (batched over 2B) for faithfulness.
    poly_codes = jnp.broadcast_to(params["poly_emb"][None], (2 * bsz, POLY_M, H))
    _embs = dot_attention(poly_codes, enc, enc)                         # [2B, 8, H]
    del _embs

    v1 = enc_nl[:, 0, :]    # cross_encoder(code, nl)  -> cand_emb = enc(nl)[:,0,:]
    v2 = enc_code[:, 0, :]  # cross_encoder(nl, code)  -> cand_emb = enc(code)[:,0,:]
    return v1, v2


# ---------------------------------------------------------------------------
if __name__ == "__main__":
    B, L, V = 2, 16, 64
    key = jax.random.PRNGKey(0)
    k1, k2, k3, k4, k5, k6, k7, k8 = jax.random.split(key, 8)

    # Deterministic synthetic parameters (shapes implied by the module).
    params = {
        "tok_emb": 0.02 * jax.random.normal(k1, (V, H), jnp.float32),
        "enc_w":   0.02 * jax.random.normal(k2, (H, H), jnp.float32),
        "enc_b":   jnp.zeros((1, H), jnp.float32),
        "poly_emb": 0.02 * jax.random.normal(k3, (POLY_M, H), jnp.float32),  # nn.Embedding(8,768)
    }
    code_inputs = jax.random.randint(k4, (B, L), 0, V, dtype=jnp.int32)
    nl_inputs = jax.random.randint(k5, (B, L), 0, V, dtype=jnp.int32)

    v1, v2 = co_model_forward(code_inputs, nl_inputs, params)
    jax.block_until_ready((v1, v2))
    assert v1.shape == (B, H) and v2.shape == (B, H)

    # Outputs must match the (un-batched) reference encoder path.
    ref_v1 = synthetic_encoder(nl_inputs, params)[:, 0, :]
    ref_v2 = synthetic_encoder(code_inputs, params)[:, 0, :]
    np.testing.assert_allclose(np.asarray(v1), np.asarray(ref_v1), rtol=2e-2, atol=2e-2)
    np.testing.assert_allclose(np.asarray(v2), np.asarray(ref_v2), rtol=2e-2, atol=2e-2)

    # Correctness check of the Pallas dot_attention hot path vs pure jnp.
    def ref_dot_attention(q, k, v):
        s = jnp.einsum("bmh,blh->bml", q, k)
        p = jax.nn.softmax(s, axis=-1)
        return jnp.einsum("bml,blh->bmh", p, v)

    q_t = 0.1 * jax.random.normal(k6, (B, POLY_M, H), jnp.float32)
    kv_t = 0.1 * jax.random.normal(k7, (B, L, H), jnp.float32)
    out_pallas = jax.block_until_ready(dot_attention(q_t, kv_t, kv_t))
    out_ref = jax.block_until_ready(ref_dot_attention(q_t, kv_t, kv_t))
    np.testing.assert_allclose(np.asarray(out_pallas), np.asarray(out_ref),
                               rtol=1e-2, atol=1e-2)

    # Correctness check of the tiled bf16 linear_tanh encoder kernel.
    x_t = 0.1 * jax.random.normal(k8, (B * L, H), jnp.float32)
    lt_pallas = jax.block_until_ready(linear_tanh(x_t, params["enc_w"], params["enc_b"]))
    lt_ref = jnp.tanh(x_t @ params["enc_w"] + params["enc_b"])
    np.testing.assert_allclose(np.asarray(lt_pallas), np.asarray(lt_ref),
                               rtol=2e-2, atol=2e-2)

    print("KERNEL_OK")
</pallas_src>

<mosaic_0001>
module attributes {stable_mosaic.version = 11 : i64} {
  func.func @_linear_tanh_kernel(%arg0: i32, %arg1: memref<32x768xbf16, #tpu.memory_space<vmem>>, %arg2: memref<768x768xbf16, #tpu.memory_space<vmem>>, %arg3: memref<1x768xf32, #tpu.memory_space<vmem>>, %arg4: memref<32x768xf32, #tpu.memory_space<vmem>>) attributes {dimension_semantics = [#tpu.dimension_semantics<parallel>], iteration_bounds = array<i64: 2>, scalar_prefetch = 0 : i64, scratch_operands = 0 : i64, tpu.core_type = #tpu.core_type<tc>, window_params = [{transform_indices = @transform_0, window_bounds = array<i64: 32, 768>}, {pipeline_mode = #tpu.pipeline_mode<synchronous>, transform_indices = @transform_1, window_bounds = array<i64: 768, 768>}, {pipeline_mode = #tpu.pipeline_mode<synchronous>, transform_indices = @transform_2, window_bounds = array<i64: 1, 768>}, {transform_indices = @transform_3, window_bounds = array<i64: 32, 768>}]} {
    %c0 = arith.constant 0 : index
    %c0_0 = arith.constant 0 : index
    %0 = vector.load %arg1[%c0, %c0_0] : memref<32x768xbf16, #tpu.memory_space<vmem>>, vector<32x768xbf16>
    %c0_1 = arith.constant 0 : index
    %c0_2 = arith.constant 0 : index
    %1 = vector.load %arg2[%c0_1, %c0_2] : memref<768x768xbf16, #tpu.memory_space<vmem>>, vector<768x768xbf16>
    %cst = arith.constant dense<0.000000e+00> : vector<32x768xf32>
    %2 = tpu.matmul %0, %1, %cst {dimension_numbers = #tpu.dot_dimension_numbers<[1], [0], [0], [1], [0, 0, 1, 1], [], []>} : vector<32x768xbf16>, vector<768x768xbf16>, vector<32x768xf32> -> vector<32x768xf32>
    %c0_3 = arith.constant 0 : index
    %c0_4 = arith.constant 0 : index
    %3 = vector.load %arg3[%c0_3, %c0_4] : memref<1x768xf32, #tpu.memory_space<vmem>>, vector<1x768xf32>
    %4 = vector.broadcast %3 : vector<1x768xf32> to vector<32x768xf32>
    %5 = arith.addf %2, %4 : vector<32x768xf32>
    %6 = math.tanh %5 : vector<32x768xf32>
    %c0_5 = arith.constant 0 : index
    %c0_6 = arith.constant 0 : index
    %7 = vector.load %arg4[%c0_5, %c0_6] : memref<32x768xf32, #tpu.memory_space<vmem>>, vector<32x768xf32>
    tpu.vector_store %arg4[%c0_5, %c0_6], %6 {strides = array<i32>} : memref<32x768xf32, #tpu.memory_space<vmem>>, vector<32x768xf32>,
    return
  }
  func.func @transform_0(%arg0: i32) -> (i32, i32) {
    %c0_i32 = arith.constant 0 : i32
    %c0_i32_0 = arith.constant 0 : i32
    return %arg0, %c0_i32 : i32, i32
  }
  func.func @transform_1(%arg0: i32) -> (i32, i32) {
    %c0_i32 = arith.constant 0 : i32
    %c0_i32_0 = arith.constant 0 : i32
    %c0_i32_1 = arith.constant 0 : i32
    return %c0_i32, %c0_i32_0 : i32, i32
  }
  func.func @transform_2(%arg0: i32) -> (i32, i32) {
    %c0_i32 = arith.constant 0 : i32
    %c0_i32_0 = arith.constant 0 : i32
    %c0_i32_1 = arith.constant 0 : i32
    return %c0_i32, %c0_i32_0 : i32, i32
  }
  func.func @transform_3(%arg0: i32) -> (i32, i32) {
    %c0_i32 = arith.constant 0 : i32
    %c0_i32_0 = arith.constant 0 : i32
    return %arg0, %c0_i32 : i32, i32
  }
}

</mosaic_0001>

<llo_original>
// kernel: co_model_forward.1
$region0: #{co_model_forward.1}
  #allocation0 [shape = 'u32[]', space=smem, size = 0x4, offset = 0x4, fixed_abs, tag = 'smem constant byte address 0x4 - core index']
  #allocation1 [shape = 'u32[144,128]{1,0:T(1,128)}', space=vmem, size = 0x12000, scoped, tag = 'internal scratch']
  %s0 = inlined_call_operand.vmem [shape: bf16[64,768], index: 0, kind: input, shape index: {}]
  %s1 = inlined_call_operand.vmem [shape: bf16[768,768], index: 1, kind: input, shape index: {}]
  %s2 = inlined_call_operand.vmem [shape: f32[1,768], index: 2, kind: input, shape index: {}]
  %s3 = inlined_call_operand.vmem [shape: f32[64,768], index: 3, kind: output, shape index: {}]
  %s4 = sld [smem:[#allocation0]]
  $region45: #{co_model_forward.1} parent=0
    _
  %s6 = ssub.s32 1, %s4
  %s7 = scalar_select 0, %s6, %s4
  loop: start=0, step=1, limit=4
  $region2: #{co_model_forward.1} parent=0 // loop_pre_header
    _
  $region3: #{co_model_forward.1} parent=0 // loop_header
    %s9 = sphi 0, %s13
    %p10 = scmp.ge.s32.totalorder %s9, 4
    %s19 = sphi 0, %s21
    %s22 = sphi 0, %s19
    %s23 = sphi 0, %s22
    %s39 = sphi 0, %s23
    %s43 = sphi 0, %s43
    %s45 = sphi 0, %s43
    %s46 = sphi 0, %s45
    %s60 = sphi 0, %s46
    %s64 = sphi 0, %s64
    %s66 = sphi 0, %s64
    %s67 = sphi 0, %s66
    %s81 = sphi 0, %s67
    %s87 = sphi 0, %s89
    %s90 = sphi 0, %s87
    %s91 = sphi 0, %s90
    %s107 = sphi 0, %s91
  $region4: #{co_model_forward.1} parent=0 // loop_header_branch
    %12 = sbr.rel (%p10) target = $region8
  $region5: #{co_model_forward.1} parent=0 // loop_body
    %s14 = ssub.s32 %s9, 1
    %s15 = ssub.s32 %s9, 2
    %s16 = sadd.s32 %s9, 1
    %s17 = ssub.s32 %s9, %s16
    %p18 = scmp.eq.s32.totalorder %s17, 0
    %s20 = sadd.s32 %s19, 1
    %s21 = scalar_select %p18, %s19, %s20
    %p24 = pneg %p18
    %p25 = scmp.eq.s32.totalorder %s9, 1
    %p26 = por %p24, %p25
    %p27 = scmp.ne.s32.totalorder %s19, %s22
    %p28 = scmp.eq.s32.totalorder %s9, 0
    %p29 = por %p27, %p28
    %p30 = scmp.ne.s32.totalorder %s19, %s22
    %p31 = scmp.eq.s32.totalorder %s14, 1
    %p32 = por %p30, %p31
    %p33 = scmp.ne.s32.totalorder %s22, %s23
    %p34 = scmp.eq.s32.totalorder %s14, 0
    %p35 = por %p33, %p34
    %p36 = scmp.ne.s32.totalorder %s22, %s23
    %p37 = scmp.eq.s32.totalorder %s15, 1
    %p38 = por %p36, %p37
    %p40 = scmp.ne.s32.totalorder %s23, %s39
    %p41 = scmp.eq.s32.totalorder %s15, 0
    %p42 = por %p40, %p41
    %s44 = sadd.s32 %s43, 1
    %p47 = scmp.eq.s32.totalorder %s9, 1
    %p48 = scmp.ne.s32.totalorder %s43, %s45
    %p49 = scmp.eq.s32.totalorder %s9, 0
    %p50 = por %p48, %p49
    %p51 = scmp.ne.s32.totalorder %s43, %s45
    %p52 = scmp.eq.s32.totalorder %s14, 1
    %p53 = por %p51, %p52
    %p54 = scmp.ne.s32.totalorder %s45, %s46
    %p55 = scmp.eq.s32.totalorder %s14, 0
    %p56 = por %p54, %p55
    %p57 = scmp.ne.s32.totalorder %s45, %s46
    %p58 = scmp.eq.s32.totalorder %s15, 1
    %p59 = por %p57, %p58
    %p61 = scmp.ne.s32.totalorder %s46, %s60
    %p62 = scmp.eq.s32.totalorder %s15, 0
    %p63 = por %p61, %p62
    %s65 = sadd.s32 %s64, 1
    %p68 = scmp.eq.s32.totalorder %s9, 1
    %p69 = scmp.ne.s32.totalorder %s64, %s66
    %p70 = scmp.eq.s32.totalorder %s9, 0
    %p71 = por %p69, %p70
    %p72 = scmp.ne.s32.totalorder %s64, %s66
    %p73 = scmp.eq.s32.totalorder %s14, 1
    %p74 = por %p72, %p73
    %p75 = scmp.ne.s32.totalorder %s66, %s67
    %p76 = scmp.eq.s32.totalorder %s14, 0
    %p77 = por %p75, %p76
    %p78 = scmp.ne.s32.totalorder %s66, %s67
    %p79 = scmp.eq.s32.totalorder %s15, 1
    %p80 = por %p78, %p79
    %p82 = scmp.ne.s32.totalorder %s67, %s81
    %p83 = scmp.eq.s32.totalorder %s15, 0
    %p84 = por %p82, %p83
    %s85 = ssub.s32 %s9, %s16
    %p86 = scmp.eq.s32.totalorder %s85, 0
    %s88 = sadd.s32 %s87, 1
    %s89 = scalar_select %p86, %s87, %s88
    %p92 = pneg %p86
    %p93 = scmp.eq.s32.totalorder %s9, 1
    %p94 = por %p92, %p93
    %p95 = scmp.ne.s32.totalorder %s87, %s90
    %p96 = scmp.eq.s32.totalorder %s9, 0
    %p97 = por %p95, %p96
    %p98 = scmp.ne.s32.totalorder %s87, %s90
    %p99 = scmp.eq.s32.totalorder %s14, 1
    %p100 = por %p98, %p99
    %p101 = scmp.ne.s32.totalorder %s90, %s91
    %p102 = scmp.eq.s32.totalorder %s14, 0
    %p103 = por %p101, %p102
    %p104 = scmp.ne.s32.totalorder %s90, %s91
    %p105 = scmp.eq.s32.totalorder %s15, 1
    %p106 = por %p104, %p105
    %p108 = scmp.ne.s32.totalorder %s91, %s107
    %p109 = scmp.eq.s32.totalorder %s15, 0
    %p110 = por %p108, %p109
    %p111 = scmp.le.s32.totalorder 1, %s9
    %p112 = scmp.lt.s32.totalorder %s9, 3
    %p113 = pnand %p111, %p112
    %p114 = pneg %p113
    // Predicated region
    $region9: #{co_model_forward.1} parent=5 // pred_check
      _
    $region10: #{co_model_forward.1} parent=5 // pred_check_branch
      %116 = sbr.rel (%p113) target = $region12
    $region11: #{co_model_forward.1} parent=5 // pred_region
      %s117 = ssub.s32 %s9, 1
      // Predicated region
      $region13: #{co_model_forward.1} parent=11 // pred_check
        %p118 = pneg %p56
      $region14: #{co_model_forward.1} parent=11 // pred_check_branch
        %120 = sbr.rel (%p118) target = $region16
      $region15: #{co_model_forward.1} parent=11 // pred_region
        _
      $region16: #{co_model_forward.1} parent=11 // pred_fallthru
        _
      // Predicated region
      $region17: #{co_model_forward.1} parent=11 // pred_check
        %p121 = pneg %p77
      $region18: #{co_model_forward.1} parent=11 // pred_check_branch
        %123 = sbr.rel (%p121) target = $region20
      $region19: #{co_model_forward.1} parent=11 // pred_region
        _
      $region20: #{co_model_forward.1} parent=11 // pred_fallthru
        _
    $region12: #{co_model_forward.1} parent=5 // pred_fallthru
      _
    %p124 = scmp.lt.s32.totalorder %s9, 2
    // Predicated region
    $region21: #{co_model_forward.1} parent=5 // pred_check
      %p125 = pneg %p124
    $region22: #{co_model_forward.1} parent=5 // pred_check_branch
      %127 = sbr.rel (%p125) target = $region24
    $region23: #{co_model_forward.1} parent=5 // pred_region
      // Predicated region
      $region25: #{co_model_forward.1} parent=23 // pred_check
        %p128 = pneg %p29
      $region26: #{co_model_forward.1} parent=23 // pred_check_branch
        %130 = sbr.rel (%p128) target = $region28
      $region27: #{co_model_forward.1} parent=23 // pred_region
        %s131 = smul.u32 4, %s9
        %p132 = scmp.lt.s32.totalorder %s131, 7
        %s133 = scalar_select %p132, %s131, 7
        %s134 = smul.addr %s133, 6
        %s135 = smul.addr %s134, 4
        %s136 = scalar_lea.vmem %s0, %s135
        %s137 = smul.u32 4, %s9
      $region28: #{co_model_forward.1} parent=23 // pred_fallthru
        _
    $region24: #{co_model_forward.1} parent=5 // pred_fallthru
      _
    %p138 = scmp.le.s32.totalorder 1, %s9
    %p139 = scmp.lt.s32.totalorder %s9, 3
    %p140 = pnand %p138, %p139
    %p141 = pneg %p140
    // Predicated region
    $region29: #{co_model_forward.1} parent=5 // pred_check
      _
    $region30: #{co_model_forward.1} parent=5 // pred_check_branch
      %143 = sbr.rel (%p140) target = $region32
    $region31: #{co_model_forward.1} parent=5 // pred_region
      %s144 = ssub.s32 %s9, 1
      %s145 = smul.u32 4, %s14
      %p146 = scmp.lt.s32.totalorder %s145, 7
      %s147 = scalar_select %p146, %s145, 7
      %s148 = smul.addr %s147, 6
      %s149 = smul.addr %s148, 4
      %s150 = scalar_lea.vmem %s0, %s149
      %p151 = pneg %p35
      %p152 = pneg %p32
      %p153 = pneg %p56
      %p154 = pneg %p53
      %p155 = pneg %p77
      %p156 = pneg %p74
      %p157 = pneg %p103
      %p158 = pneg %p100
      %s159 = smul.u32 4, %s14
      %p160 = scmp.lt.s32.totalorder %s159, 7
      %s161 = scalar_select %p160, %s159, 7
      %s162 = smul.addr %s161, 6
      %s163 = smul.addr %s162, 8
      %s164 = scalar_lea.vmem %s3, %s163
      %s165 = smul.u32 4, %s14
      %p166 = scmp.lt.s32.totalorder %s165, 7
      %s167 = scalar_select %p166, %s165, 7
      %s168 = smul.addr %s167, 6
      %s169 = smul.addr %s168, 4
      %s170 = scalar_lea.vmem %s0, %s169
      %s171 = smul.u32 4, %s14
      %s172 = smul.u32 4, %s14
      %p173 = scmp.lt.s32.totalorder %s172, 7
      %s174 = scalar_select %p173, %s172, 7
      %s175 = smul.addr %s174, 6
      %s176 = smul.addr %s175, 8
      %s177 = scalar_lea.vmem %s3, %s176
      %s178 = smul.u32 4, %s14
      %v179 = vld [vmem:[%s170] sm:$0xff]
      %v180 = vld [vmem:[%s170 + $0x8] sm:$0xff]
      %v181 = vld [vmem:[%s170 + $0x10] sm:$0xff]
      %v182 = vld [vmem:[%s170 + $0x18] sm:$0xff]
      %v183 = vld [vmem:[%s170 + $0x20] sm:$0xff]
      %v184 = vld [vmem:[%s170 + $0x28] sm:$0xff]
      %v185 = vld [vmem:[%s170 + $0x30] sm:$0xff]
      %v186 = vld [vmem:[%s170 + $0x38] sm:$0xff]
      %v187 = vld [vmem:[%s170 + $0x40] sm:$0xff]
      %v188 = vld [vmem:[%s170 + $0x48] sm:$0xff]
      %v189 = vld [vmem:[%s170 + $0x50] sm:$0xff]
      %v190 = vld [vmem:[%s170 + $0x58] sm:$0xff]
      %v191 = vld [vmem:[%s1] sm:$0xff]
      %v192 = vld [vmem:[%s1 + $0x8] sm:$0xff]
      %v193 = vld [vmem:[%s1 + $0x10] sm:$0xff]
      %v194 = vld [vmem:[%s1 + $0x18] sm:$0xff]
      %v195 = vld [vmem:[%s1 + $0x20] sm:$0xff]
      %v196 = vld [vmem:[%s1 + $0x28] sm:$0xff]
      %v197 = vld [vmem:[%s1 + $0x30] sm:$0xff]
      %v198 = vld [vmem:[%s1 + $0x38] sm:$0xff]
      %v199 = vld [vmem:[%s1 + $0x40] sm:$0xff]
      %v200 = vld [vmem:[%s1 + $0x48] sm:$0xff]
      %v201 = vld [vmem:[%s1 + $0x50] sm:$0xff]
      %v202 = vld [vmem:[%s1 + $0x58] sm:$0xff]
      %v203 = vld [vmem:[%s1 + $0x60] sm:$0xff]
      %v204 = vld [vmem:[%s1 + $0x68] sm:$0xff]
      %v205 = vld [vmem:[%s1 + $0x70] sm:$0xff]
      %v206 = vld [vmem:[%s1 + $0x78] sm:$0xff]
      %v207 = vld [vmem:[%s1 + $0x80] sm:$0xff]
      %v208 = vld [vmem:[%s1 + $0x88] sm:$0xff]
      %v209 = vld [vmem:[%s1 + $0x90] sm:$0xff]
      %v210 = vld [vmem:[%s1 + $0x98] sm:$0xff]
      %v211 = vld [vmem:[%s1 + $0xa0] sm:$0xff]
      %v212 = vld [vmem:[%s1 + $0xa8] sm:$0xff]
      %v213 = vld [vmem:[%s1 + $0xb0] sm:$0xff]
      %v214 = vld [vmem:[%s1 + $0xb8] sm:$0xff]
      %v215 = vld [vmem:[%s1 + $0xc0] sm:$0xff]
      %v216 = vld [vmem:[%s1 + $0xc8] sm:$0xff]
      %v217 = vld [vmem:[%s1 + $0xd0] sm:$0xff]
      %v218 = vld [vmem:[%s1 + $0xd8] sm:$0xff]
      %v219 = vld [vmem:[%s1 + $0xe0] sm:$0xff]
      %v220 = vld [vmem:[%s1 + $0xe8] sm:$0xff]
      %v221 = vld [vmem:[%s1 + $0xf0] sm:$0xff]
      %v222 = vld [vmem:[%s1 + $0xf8] sm:$0xff]
      %v223 = vld [vmem:[%s1 + $0x100] sm:$0xff]
      %v224 = vld [vmem:[%s1 + $0x108] sm:$0xff]
      %v225 = vld [vmem:[%s1 + $0x110] sm:$0xff]
      %v226 = vld [vmem:[%s1 + $0x118] sm:$0xff]
      %v227 = vld [vmem:[%s1 + $0x120] sm:$0xff]
      %v228 = vld [vmem:[%s1 + $0x128] sm:$0xff]
      %v229 = vld [vmem:[%s1 + $0x130] sm:$0xff]
      %v230 = vld [vmem:[%s1 + $0x138] sm:$0xff]
      %v231 = vld [vmem:[%s1 + $0x140] sm:$0xff]
      %v232 = vld [vmem:[%s1 + $0x148] sm:$0xff]
      %v233 = vld [vmem:[%s1 + $0x150] sm:$0xff]
      %v234 = vld [vmem:[%s1 + $0x158] sm:$0xff]
      %v235 = vld [vmem:[%s1 + $0x160] sm:$0xff]
      %v236 = vld [vmem:[%s1 + $0x168] sm:$0xff]
      %v237 = vld [vmem:[%s1 + $0x170] sm:$0xff]
      %v238 = vld [vmem:[%s1 + $0x178] sm:$0xff]
      %v239 = vld [vmem:[%s1 + $0x180] sm:$0xff]
      %v240 = vld [vmem:[%s1 + $0x188] sm:$0xff]
      %v241 = vld [vmem:[%s1 + $0x190] sm:$0xff]
      %v242 = vld [vmem:[%s1 + $0x198] sm:$0xff]
      %v243 = vld [vmem:[%s1 + $0x1a0] sm:$0xff]
      %v244 = vld [vmem:[%s1 + $0x1a8] sm:$0xff]
      %v245 = vld [vmem:[%s1 + $0x1b0] sm:$0xff]
      %v246 = vld [vmem:[%s1 + $0x1b8] sm:$0xff]
      %v247 = vld [vmem:[%s1 + $0x1c0] sm:$0xff]
      %v248 = vld [vmem:[%s1 + $0x1c8] sm:$0xff]
      %v249 = vld [vmem:[%s1 + $0x1d0] sm:$0xff]
      %v250 = vld [vmem:[%s1 + $0x1d8] sm:$0xff]
      %v251 = vld [vmem:[%s1 + $0x1e0] sm:$0xff]
      %v252 = vld [vmem:[%s1 + $0x1e8] sm:$0xff]
      %v253 = vld [vmem:[%s1 + $0x1f0] sm:$0xff]
      %v254 = vld [vmem:[%s1 + $0x1f8] sm:$0xff]
      %v255 = vld [vmem:[%s1 + $0x200] sm:$0xff]
      %v256 = vld [vmem:[%s1 + $0x208] sm:$0xff]
      %v257 = vld [vmem:[%s1 + $0x210] sm:$0xff]
      %v258 = vld [vmem:[%s1 + $0x218] sm:$0xff]
      %v259 = vld [vmem:[%s1 + $0x220] sm:$0xff]
      %v260 = vld [vmem:[%s1 + $0x228] sm:$0xff]
      %v261 = vld [vmem:[%s1 + $0x230] sm:$0xff]
      %v262 = vld [vmem:[%s1 + $0x238] sm:$0xff]
      %v263 = vld [vmem:[%s1 + $0x240] sm:$0xff]
      %v264 = vld [vmem:[%s1 + $0x248] sm:$0xff]
      %v265 = vld [vmem:[%s1 + $0x250] sm:$0xff]
      %v266 = vld [vmem:[%s1 + $0x258] sm:$0xff]
      %v267 = vld [vmem:[%s1 + $0x260] sm:$0xff]
      %v268 = vld [vmem:[%s1 + $0x268] sm:$0xff]
      %v269 = vld [vmem:[%s1 + $0x270] sm:$0xff]
      %v270 = vld [vmem:[%s1 + $0x278] sm:$0xff]
      %v271 = vld [vmem:[%s1 + $0x280] sm:$0xff]
      %v272 = vld [vmem:[%s1 + $0x288] sm:$0xff]
      %v273 = vld [vmem:[%s1 + $0x290] sm:$0xff]
      %v274 = vld [vmem:[%s1 + $0x298] sm:$0xff]
      %v275 = vld [vmem:[%s1 + $0x2a0] sm:$0xff]
      %v276 = vld [vmem:[%s1 + $0x2a8] sm:$0xff]
      %v277 = vld [vmem:[%s1 + $0x2b0] sm:$0xff]
      %v278 = vld [vmem:[%s1 + $0x2b8] sm:$0xff]
      %v279 = vld [vmem:[%s1 + $0x2c0] sm:$0xff]
      %v280 = vld [vmem:[%s1 + $0x2c8] sm:$0xff]
      %v281 = vld [vmem:[%s1 + $0x2d0] sm:$0xff]
      %v282 = vld [vmem:[%s1 + $0x2d8] sm:$0xff]
      %v283 = vld [vmem:[%s1 + $0x2e0] sm:$0xff]
      %v284 = vld [vmem:[%s1 + $0x2e8] sm:$0xff]
      %v285 = vld [vmem:[%s1 + $0x2f0] sm:$0xff]
      %v286 = vld [vmem:[%s1 + $0x2f8] sm:$0xff]
      %v287 = vld [vmem:[%s1 + $0x300] sm:$0xff]
      %v288 = vld [vmem:[%s1 + $0x308] sm:$0xff]
      %v289 = vld [vmem:[%s1 + $0x310] sm:$0xff]
      %v290 = vld [vmem:[%s1 + $0x318] sm:$0xff]
      %v291 = vld [vmem:[%s1 + $0x320] sm:$0xff]
      %v292 = vld [vmem:[%s1 + $0x328] sm:$0xff]
      %v293 = vld [vmem:[%s1 + $0x330] sm:$0xff]
      %v294 = vld [vmem:[%s1 + $0x338] sm:$0xff]
      %v295 = vld [vmem:[%s1 + $0x340] sm:$0xff]
      %v296 = vld [vmem:[%s1 + $0x348] sm:$0xff]
      %v297 = vld [vmem:[%s1 + $0x350] sm:$0xff]
      %v298 = vld [vmem:[%s1 + $0x358] sm:$0xff]
      %v299 = vld [vmem:[%s1 + $0x360] sm:$0xff]
      %v300 = vld [vmem:[%s1 + $0x368] sm:$0xff]
      %v301 = vld [vmem:[%s1 + $0x370] sm:$0xff]
      %v302 = vld [vmem:[%s1 + $0x378] sm:$0xff]
      %v303 = vld [vmem:[%s1 + $0x380] sm:$0xff]
      %v304 = vld [vmem:[%s1 + $0x388] sm:$0xff]
      %v305 = vld [vmem:[%s1 + $0x390] sm:$0xff]
      %v306 = vld [vmem:[%s1 + $0x398] sm:$0xff]
      %v307 = vld [vmem:[%s1 + $0x3a0] sm:$0xff]
      %v308 = vld [vmem:[%s1 + $0x3a8] sm:$0xff]
      %v309 = vld [vmem:[%s1 + $0x3b0] sm:$0xff]
      %v310 = vld [vmem:[%s1 + $0x3b8] sm:$0xff]
      %v311 = vld [vmem:[%s1 + $0x3c0] sm:$0xff]
      %v312 = vld [vmem:[%s1 + $0x3c8] sm:$0xff]
      %v313 = vld [vmem:[%s1 + $0x3d0] sm:$0xff]
      %v314 = vld [vmem:[%s1 + $0x3d8] sm:$0xff]
      %v315 = vld [vmem:[%s1 + $0x3e0] sm:$0xff]
      %v316 = vld [vmem:[%s1 + $0x3e8] sm:$0xff]
      %v317 = vld [vmem:[%s1 + $0x3f0] sm:$0xff]
      %v318 = vld [vmem:[%s1 + $0x3f8] sm:$0xff]
      %v319 = vld [vmem:[%s1 + $0x400] sm:$0xff]
      %v320 = vld [vmem:[%s1 + $0x408] sm:$0xff]
      %v321 = vld [vmem:[%s1 + $0x410] sm:$0xff]
      %v322 = vld [vmem:[%s1 + $0x418] sm:$0xff]
      %v323 = vld [vmem:[%s1 + $0x420] sm:$0xff]
      %v324 = vld [vmem:[%s1 + $0x428] sm:$0xff]
      %v325 = vld [vmem:[%s1 + $0x430] sm:$0xff]
      %v326 = vld [vmem:[%s1 + $0x438] sm:$0xff]
      %v327 = vld [vmem:[%s1 + $0x440] sm:$0xff]
      %v328 = vld [vmem:[%s1 + $0x448] sm:$0xff]
      %v329 = vld [vmem:[%s1 + $0x450] sm:$0xff]
      %v330 = vld [vmem:[%s1 + $0x458] sm:$0xff]
      %v331 = vld [vmem:[%s1 + $0x460] sm:$0xff]
      %v332 = vld [vmem:[%s1 + $0x468] sm:$0xff]
      %v333 = vld [vmem:[%s1 + $0x470] sm:$0xff]
      %v334 = vld [vmem:[%s1 + $0x478] sm:$0xff]
      %v335 = vld [vmem:[%s1 + $0x480] sm:$0xff]
      %v336 = vld [vmem:[%s1 + $0x488] sm:$0xff]
      %v337 = vld [vmem:[%s1 + $0x490] sm:$0xff]
      %v338 = vld [vmem:[%s1 + $0x498] sm:$0xff]
      %v339 = vld [vmem:[%s1 + $0x4a0] sm:$0xff]
      %v340 = vld [vmem:[%s1 + $0x4a8] sm:$0xff]
      %v341 = vld [vmem:[%s1 + $0x4b0] sm:$0xff]
      %v342 = vld [vmem:[%s1 + $0x4b8] sm:$0xff]
      %v343 = vld [vmem:[%s1 + $0x4c0] sm:$0xff]
      %v344 = vld [vmem:[%s1 + $0x4c8] sm:$0xff]
      %v345 = vld [vmem:[%s1 + $0x4d0] sm:$0xff]
      %v346 = vld [vmem:[%s1 + $0x4d8] sm:$0xff]
      %v347 = vld [vmem:[%s1 + $0x4e0] sm:$0xff]
      %v348 = vld [vmem:[%s1 + $0x4e8] sm:$0xff]
      %v349 = vld [vmem:[%s1 + $0x4f0] sm:$0xff]
      %v350 = vld [vmem:[%s1 + $0x4f8] sm:$0xff]
      %v351 = vld [vmem:[%s1 + $0x500] sm:$0xff]
      %v352 = vld [vmem:[%s1 + $0x508] sm:$0xff]
      %v353 = vld [vmem:[%s1 + $0x510] sm:$0xff]
      %v354 = vld [vmem:[%s1 + $0x518] sm:$0xff]
      %v355 = vld [vmem:[%s1 + $0x520] sm:$0xff]
      %v356 = vld [vmem:[%s1 + $0x528] sm:$0xff]
      %v357 = vld [vmem:[%s1 + $0x530] sm:$0xff]
      %v358 = vld [vmem:[%s1 + $0x538] sm:$0xff]
      %v359 = vld [vmem:[%s1 + $0x540] sm:$0xff]
      %v360 = vld [vmem:[%s1 + $0x548] sm:$0xff]
      %v361 = vld [vmem:[%s1 + $0x550] sm:$0xff]
      %v362 = vld [vmem:[%s1 + $0x558] sm:$0xff]
      %v363 = vld [vmem:[%s1 + $0x560] sm:$0xff]
      %v364 = vld [vmem:[%s1 + $0x568] sm:$0xff]
      %v365 = vld [vmem:[%s1 + $0x570] sm:$0xff]
      %v366 = vld [vmem:[%s1 + $0x578] sm:$0xff]
      %v367 = vld [vmem:[%s1 + $0x580] sm:$0xff]
      %v368 = vld [vmem:[%s1 + $0x588] sm:$0xff]
      %v369 = vld [vmem:[%s1 + $0x590] sm:$0xff]
      %v370 = vld [vmem:[%s1 + $0x598] sm:$0xff]
      %v371 = vld [vmem:[%s1 + $0x5a0] sm:$0xff]
      %v372 = vld [vmem:[%s1 + $0x5a8] sm:$0xff]
      %v373 = vld [vmem:[%s1 + $0x5b0] sm:$0xff]
      %v374 = vld [vmem:[%s1 + $0x5b8] sm:$0xff]
      %v375 = vld [vmem:[%s1 + $0x5c0] sm:$0xff]
      %v376 = vld [vmem:[%s1 + $0x5c8] sm:$0xff]
      %v377 = vld [vmem:[%s1 + $0x5d0] sm:$0xff]
      %v378 = vld [vmem:[%s1 + $0x5d8] sm:$0xff]
      %v379 = vld [vmem:[%s1 + $0x5e0] sm:$0xff]
      %v380 = vld [vmem:[%s1 + $0x5e8] sm:$0xff]
      %v381 = vld [vmem:[%s1 + $0x5f0] sm:$0xff]
      %v382 = vld [vmem:[%s1 + $0x5f8] sm:$0xff]
      %v383 = vld [vmem:[%s1 + $0x600] sm:$0xff]
      %v384 = vld [vmem:[%s1 + $0x608] sm:$0xff]
      %v385 = vld [vmem:[%s1 + $0x610] sm:$0xff]
      %v386 = vld [vmem:[%s1 + $0x618] sm:$0xff]
      %v387 = vld [vmem:[%s1 + $0x620] sm:$0xff]
      %v388 = vld [vmem:[%s1 + $0x628] sm:$0xff]
      %v389 = vld [vmem:[%s1 + $0x630] sm:$0xff]
      %v390 = vld [vmem:[%s1 + $0x638] sm:$0xff]
      %v391 = vld [vmem:[%s1 + $0x640] sm:$0xff]
      %v392 = vld [vmem:[%s1 + $0x648] sm:$0xff]
      %v393 = vld [vmem:[%s1 + $0x650] sm:$0xff]
      %v394 = vld [vmem:[%s1 + $0x658] sm:$0xff]
      %v395 = vld [vmem:[%s1 + $0x660] sm:$0xff]
      %v396 = vld [vmem:[%s1 + $0x668] sm:$0xff]
      %v397 = vld [vmem:[%s1 + $0x670] sm:$0xff]
      %v398 = vld [vmem:[%s1 + $0x678] sm:$0xff]
      %v399 = vld [vmem:[%s1 + $0x680] sm:$0xff]
      %v400 = vld [vmem:[%s1 + $0x688] sm:$0xff]
      %v401 = vld [vmem:[%s1 + $0x690] sm:$0xff]
      %v402 = vld [vmem:[%s1 + $0x698] sm:$0xff]
      %v403 = vld [vmem:[%s1 + $0x6a0] sm:$0xff]
      %v404 = vld [vmem:[%s1 + $0x6a8] sm:$0xff]
      %v405 = vld [vmem:[%s1 + $0x6b0] sm:$0xff]
      %v406 = vld [vmem:[%s1 + $0x6b8] sm:$0xff]
      %v407 = vld [vmem:[%s1 + $0x6c0] sm:$0xff]
      %v408 = vld [vmem:[%s1 + $0x6c8] sm:$0xff]
      %v409 = vld [vmem:[%s1 + $0x6d0] sm:$0xff]
      %v410 = vld [vmem:[%s1 + $0x6d8] sm:$0xff]
      %v411 = vld [vmem:[%s1 + $0x6e0] sm:$0xff]
      %v412 = vld [vmem:[%s1 + $0x6e8] sm:$0xff]
      %v413 = vld [vmem:[%s1 + $0x6f0] sm:$0xff]
      %v414 = vld [vmem:[%s1 + $0x6f8] sm:$0xff]
      %v415 = vld [vmem:[%s1 + $0x700] sm:$0xff]
      %v416 = vld [vmem:[%s1 + $0x708] sm:$0xff]
      %v417 = vld [vmem:[%s1 + $0x710] sm:$0xff]
      %v418 = vld [vmem:[%s1 + $0x718] sm:$0xff]
      %v419 = vld [vmem:[%s1 + $0x720] sm:$0xff]
      %v420 = vld [vmem:[%s1 + $0x728] sm:$0xff]
      %v421 = vld [vmem:[%s1 + $0x730] sm:$0xff]
      %v422 = vld [vmem:[%s1 + $0x738] sm:$0xff]
      %v423 = vld [vmem:[%s1 + $0x740] sm:$0xff]
      %v424 = vld [vmem:[%s1 + $0x748] sm:$0xff]
      %v425 = vld [vmem:[%s1 + $0x750] sm:$0xff]
      %v426 = vld [vmem:[%s1 + $0x758] sm:$0xff]
      %v427 = vld [vmem:[%s1 + $0x760] sm:$0xff]
      %v428 = vld [vmem:[%s1 + $0x768] sm:$0xff]
      %v429 = vld [vmem:[%s1 + $0x770] sm:$0xff]
      %v430 = vld [vmem:[%s1 + $0x778] sm:$0xff]
      %v431 = vld [vmem:[%s1 + $0x780] sm:$0xff]
      %v432 = vld [vmem:[%s1 + $0x788] sm:$0xff]
      %v433 = vld [vmem:[%s1 + $0x790] sm:$0xff]
      %v434 = vld [vmem:[%s1 + $0x798] sm:$0xff]
      %v435 = vld [vmem:[%s1 + $0x7a0] sm:$0xff]
      %v436 = vld [vmem:[%s1 + $0x7a8] sm:$0xff]
      %v437 = vld [vmem:[%s1 + $0x7b0] sm:$0xff]
      %v438 = vld [vmem:[%s1 + $0x7b8] sm:$0xff]
      %v439 = vld [vmem:[%s1 + $0x7c0] sm:$0xff]
      %v440 = vld [vmem:[%s1 + $0x7c8] sm:$0xff]
      %v441 = vld [vmem:[%s1 + $0x7d0] sm:$0xff]
      %v442 = vld [vmem:[%s1 + $0x7d8] sm:$0xff]
      %v443 = vld [vmem:[%s1 + $0x7e0] sm:$0xff]
      %v444 = vld [vmem:[%s1 + $0x7e8] sm:$0xff]
      %v445 = vld [vmem:[%s1 + $0x7f0] sm:$0xff]
      %v446 = vld [vmem:[%s1 + $0x7f8] sm:$0xff]
      %v447 = vld [vmem:[%s1 + $0x800] sm:$0xff]
      %v448 = vld [vmem:[%s1 + $0x808] sm:$0xff]
      %v449 = vld [vmem:[%s1 + $0x810] sm:$0xff]
      %v450 = vld [vmem:[%s1 + $0x818] sm:$0xff]
      %v451 = vld [vmem:[%s1 + $0x820] sm:$0xff]
      %v452 = vld [vmem:[%s1 + $0x828] sm:$0xff]
      %v453 = vld [vmem:[%s1 + $0x830] sm:$0xff]
      %v454 = vld [vmem:[%s1 + $0x838] sm:$0xff]
      %v455 = vld [vmem:[%s1 + $0x840] sm:$0xff]
      %v456 = vld [vmem:[%s1 + $0x848] sm:$0xff]
      %v457 = vld [vmem:[%s1 + $0x850] sm:$0xff]
      %v458 = vld [vmem:[%s1 + $0x858] sm:$0xff]
      %v459 = vld [vmem:[%s1 + $0x860] sm:$0xff]
      %v460 = vld [vmem:[%s1 + $0x868] sm:$0xff]
      %v461 = vld [vmem:[%s1 + $0x870] sm:$0xff]
      %v462 = vld [vmem:[%s1 + $0x878] sm:$0xff]
      %v463 = vld [vmem:[%s1 + $0x880] sm:$0xff]
      %v464 = vld [vmem:[%s1 + $0x888] sm:$0xff]
      %v465 = vld [vmem:[%s1 + $0x890] sm:$0xff]
      %v466 = vld [vmem:[%s1 + $0x898] sm:$0xff]
      %v467 = vld [vmem:[%s1 + $0x8a0] sm:$0xff]
      %v468 = vld [vmem:[%s1 + $0x8a8] sm:$0xff]
      %v469 = vld [vmem:[%s1 + $0x8b0] sm:$0xff]
      %v470 = vld [vmem:[%s1 + $0x8b8] sm:$0xff]
      %v471 = vld [vmem:[%s1 + $0x8c0] sm:$0xff]
      %v472 = vld [vmem:[%s1 + $0x8c8] sm:$0xff]
      %v473 = vld [vmem:[%s1 + $0x8d0] sm:$0xff]
      %v474 = vld [vmem:[%s1 + $0x8d8] sm:$0xff]
      %v475 = vld [vmem:[%s1 + $0x8e0] sm:$0xff]
      %v476 = vld [vmem:[%s1 + $0x8e8] sm:$0xff]
      %v477 = vld [vmem:[%s1 + $0x8f0] sm:$0xff]
      %v478 = vld [vmem:[%s1 + $0x8f8] sm:$0xff]
      %v479 = vld [vmem:[%s2] sm:$0x3f]
      %v481 = vlaneseq
      %v482 = vshrl.u32 %v481, 7
      %v483 = vsub.s32 0, %v482
      %v484 = vrot.slane %v479, %v483
      %v485 = vlaneseq
      %v486 = vshrl.u32 %v485, 7
      %v487 = vsub.s32 1, %v486
      %v488 = vrot.slane %v479, %v487
      %v489 = vlaneseq
      %v490 = vshrl.u32 %v489, 7
      %v491 = vsub.s32 2, %v490
      %v492 = vrot.slane %v479, %v491
      %v493 = vlaneseq
      %v494 = vshrl.u32 %v493, 7
      %v495 = vsub.s32 3, %v494
      %v496 = vrot.slane %v479, %v495
      %v497 = vlaneseq
      %v498 = vshrl.u32 %v497, 7
      %v499 = vsub.s32 4, %v498
      %v500 = vrot.slane %v479, %v499
      %v501 = vlaneseq
      %v502 = vshrl.u32 %v501, 7
      %v503 = vsub.s32 5, %v502
      %v504 = vrot.slane %v479, %v503
      %v523 = vunpack.c.l.b16 %v179
      %v524 = vunpack.c.h.b16 %v179
      %v525 = vunpack.c.l.b16 %v180
      %v526 = vunpack.c.h.b16 %v180
      %v527 = vunpack.c.l.b16 %v181
      %v528 = vunpack.c.h.b16 %v181
      %v529 = vunpack.c.l.b16 %v182
      %v530 = vunpack.c.h.b16 %v182
      %v531 = vunpack.c.l.b16 %v183
      %v532 = vunpack.c.h.b16 %v183
      %v533 = vunpack.c.l.b16 %v184
      %v534 = vunpack.c.h.b16 %v184
      %v535 = vunpack.c.l.b16 %v185
      %v536 = vunpack.c.h.b16 %v185
      %v537 = vunpack.c.l.b16 %v186
      %v538 = vunpack.c.h.b16 %v186
      %v539 = vunpack.c.l.b16 %v187
      %v540 = vunpack.c.h.b16 %v187
      %v541 = vunpack.c.l.b16 %v188
      %v542 = vunpack.c.h.b16 %v188
      %v543 = vunpack.c.l.b16 %v189
      %v544 = vunpack.c.h.b16 %v189
      %v545 = vunpack.c.l.b16 %v190
      %v546 = vunpack.c.h.b16 %v190
      %v547 = vpack.c.b16 %v529, %v523
      %v548 = vpack.c.b16 %v530, %v524
      %v549 = vpack.c.b16 %v531, %v525
      %v550 = vpack.c.b16 %v532, %v526
      %v551 = vpack.c.b16 %v533, %v527
      %v552 = vpack.c.b16 %v534, %v528
      %v553 = vpack.c.b16 %v541, %v535
      %v554 = vpack.c.b16 %v542, %v536
      %v555 = vpack.c.b16 %v543, %v537
      %v556 = vpack.c.b16 %v544, %v538
      %v557 = vpack.c.b16 %v545, %v539
      %v558 = vpack.c.b16 %v546, %v540
      %v859 = vunpack.c.l.b16 %v191
      %v860 = vunpack.c.h.b16 %v191
      %v861 = vunpack.c.l.b16 %v192
      %v862 = vunpack.c.h.b16 %v192
      %v863 = vunpack.c.l.b16 %v193
      %v864 = vunpack.c.h.b16 %v193
      %v865 = vunpack.c.l.b16 %v194
      %v866 = vunpack.c.h.b16 %v194
      %v867 = vunpack.c.l.b16 %v195
      %v868 = vunpack.c.h.b16 %v195
      %v869 = vunpack.c.l.b16 %v196
      %v870 = vunpack.c.h.b16 %v196
      %v871 = vunpack.c.l.b16 %v197
      %v872 = vunpack.c.h.b16 %v197
      %v873 = vunpack.c.l.b16 %v198
      %v874 = vunpack.c.h.b16 %v198
      %v875 = vunpack.c.l.b16 %v199
      %v876 = vunpack.c.h.b16 %v199
      %v877 = vunpack.c.l.b16 %v200
      %v878 = vunpack.c.h.b16 %v200
      %v879 = vunpack.c.l.b16 %v201
      %v880 = vunpack.c.h.b16 %v201
      %v881 = vunpack.c.l.b16 %v202
      %v882 = vunpack.c.h.b16 %v202
      %v883 = vunpack.c.l.b16 %v203
      %v884 = vunpack.c.h.b16 %v203
      %v885 = vunpack.c.l.b16 %v204
      %v886 = vunpack.c.h.b16 %v204
      %v887 = vunpack.c.l.b16 %v205
      %v888 = vunpack.c.h.b16 %v205
      %v889 = vunpack.c.l.b16 %v206
      %v890 = vunpack.c.h.b16 %v206
      %v891 = vunpack.c.l.b16 %v207
      %v892 = vunpack.c.h.b16 %v207
      %v893 = vunpack.c.l.b16 %v208
      %v894 = vunpack.c.h.b16 %v208
      %v895 = vunpack.c.l.b16 %v209
      %v896 = vunpack.c.h.b16 %v209
      %v897 = vunpack.c.l.b16 %v210
      %v898 = vunpack.c.h.b16 %v210
      %v899 = vunpack.c.l.b16 %v211
      %v900 = vunpack.c.h.b16 %v211
      %v901 = vunpack.c.l.b16 %v212
      %v902 = vunpack.c.h.b16 %v212
      %v903 = vunpack.c.l.b16 %v213
      %v904 = vunpack.c.h.b16 %v213
      %v905 = vunpack.c.l.b16 %v214
      %v906 = vunpack.c.h.b16 %v214
      %v907 = vunpack.c.l.b16 %v215
      %v908 = vunpack.c.h.b16 %v215
      %v909 = vunpack.c.l.b16 %v216
      %v910 = vunpack.c.h.b16 %v216
      %v911 = vunpack.c.l.b16 %v217
      %v912 = vunpack.c.h.b16 %v217
      %v913 = vunpack.c.l.b16 %v218
      %v914 = vunpack.c.h.b16 %v218
      %v915 = vunpack.c.l.b16 %v219
      %v916 = vunpack.c.h.b16 %v219
      %v917 = vunpack.c.l.b16 %v220
      %v918 = vunpack.c.h.b16 %v220
      %v919 = vunpack.c.l.b16 %v221
      %v920 = vunpack.c.h.b16 %v221
      %v921 = vunpack.c.l.b16 %v222
      %v922 = vunpack.c.h.b16 %v222
      %v923 = vunpack.c.l.b16 %v223
      %v924 = vunpack.c.h.b16 %v223
      %v925 = vunpack.c.l.b16 %v224
      %v926 = vunpack.c.h.b16 %v224
      %v927 = vunpack.c.l.b16 %v225
      %v928 = vunpack.c.h.b16 %v225
      %v929 = vunpack.c.l.b16 %v226
      %v930 = vunpack.c.h.b16 %v226
      %v931 = vunpack.c.l.b16 %v227
      %v932 = vunpack.c.h.b16 %v227
      %v933 = vunpack.c.l.b16 %v228
      %v934 = vunpack.c.h.b16 %v228
      %v935 = vunpack.c.l.b16 %v229
      %v936 = vunpack.c.h.b16 %v229
      %v937 = vunpack.c.l.b16 %v230
      %v938 = vunpack.c.h.b16 %v230
      %v939 = vunpack.c.l.b16 %v231
      %v940 = vunpack.c.h.b16 %v231
      %v941 = vunpack.c.l.b16 %v232
      %v942 = vunpack.c.h.b16 %v232
      %v943 = vunpack.c.l.b16 %v233
      %v944 = vunpack.c.h.b16 %v233
      %v945 = vunpack.c.l.b16 %v234
      %v946 = vunpack.c.h.b16 %v234
      %v947 = vunpack.c.l.b16 %v235
      %v948 = vunpack.c.h.b16 %v235
      %v949 = vunpack.c.l.b16 %v236
      %v950 = vunpack.c.h.b16 %v236
      %v951 = vunpack.c.l.b16 %v237
      %v952 = vunpack.c.h.b16 %v237
      %v953 = vunpack.c.l.b16 %v238
      %v954 = vunpack.c.h.b16 %v238
      %v955 = vunpack.c.l.b16 %v239
      %v956 = vunpack.c.h.b16 %v239
      %v957 = vunpack.c.l.b16 %v240
      %v958 = vunpack.c.h.b16 %v240
      %v959 = vunpack.c.l.b16 %v241
      %v960 = vunpack.c.h.b16 %v241
      %v961 = vunpack.c.l.b16 %v242
      %v962 = vunpack.c.h.b16 %v242
      %v963 = vunpack.c.l.b16 %v243
      %v964 = vunpack.c.h.b16 %v243
      %v965 = vunpack.c.l.b16 %v244
      %v966 = vunpack.c.h.b16 %v244
      %v967 = vunpack.c.l.b16 %v245
      %v968 = vunpack.c.h.b16 %v245
      %v969 = vunpack.c.l.b16 %v246
      %v970 = vunpack.c.h.b16 %v246
      %v971 = vunpack.c.l.b16 %v247
      %v972 = vunpack.c.h.b16 %v247
      %v973 = vunpack.c.l.b16 %v248
      %v974 = vunpack.c.h.b16 %v248
      %v975 = vunpack.c.l.b16 %v249
      %v976 = vunpack.c.h.b16 %v249
      %v977 = vunpack.c.l.b16 %v250
      %v978 = vunpack.c.h.b16 %v250
      %v979 = vunpack.c.l.b16 %v251
      %v980 = vunpack.c.h.b16 %v251
      %v981 = vunpack.c.l.b16 %v252
      %v982 = vunpack.c.h.b16 %v252
      %v983 = vunpack.c.l.b16 %v253
      %v984 = vunpack.c.h.b16 %v253
      %v985 = vunpack.c.l.b16 %v254
      %v986 = vunpack.c.h.b16 %v254
      %v987 = vunpack.c.l.b16 %v255
      %v988 = vunpack.c.h.b16 %v255
      %v989 = vunpack.c.l.b16 %v256
      %v990 = vunpack.c.h.b16 %v256
      %v991 = vunpack.c.l.b16 %v257
      %v992 = vunpack.c.h.b16 %v257
      %v993 = vunpack.c.l.b16 %v258
      %v994 = vunpack.c.h.b16 %v258
      %v995 = vunpack.c.l.b16 %v259
      %v996 = vunpack.c.h.b16 %v259
      %v997 = vunpack.c.l.b16 %v260
      %v998 = vunpack.c.h.b16 %v260
      %v999 = vunpack.c.l.b16 %v261
      %v1000 = vunpack.c.h.b16 %v261
      %v1001 = vunpack.c.l.b16 %v262
      %v1002 = vunpack.c.h.b16 %v262
      %v1003 = vunpack.c.l.b16 %v263
      %v1004 = vunpack.c.h.b16 %v263
      %v1005 = vunpack.c.l.b16 %v264
      %v1006 = vunpack.c.h.b16 %v264
      %v1007 = vunpack.c.l.b16 %v265
      %v1008 = vunpack.c.h.b16 %v265
      %v1009 = vunpack.c.l.b16 %v266
      %v1010 = vunpack.c.h.b16 %v266
      %v1011 = vunpack.c.l.b16 %v267
      %v1012 = vunpack.c.h.b16 %v267
      %v1013 = vunpack.c.l.b16 %v268
      %v1014 = vunpack.c.h.b16 %v268
      %v1015 = vunpack.c.l.b16 %v269
      %v1016 = vunpack.c.h.b16 %v269
      %v1017 = vunpack.c.l.b16 %v270
      %v1018 = vunpack.c.h.b16 %v270
      %v1019 = vunpack.c.l.b16 %v271
      %v1020 = vunpack.c.h.b16 %v271
      %v1021 = vunpack.c.l.b16 %v272
      %v1022 = vunpack.c.h.b16 %v272
      %v1023 = vunpack.c.l.b16 %v273
      %v1024 = vunpack.c.h.b16 %v273
      %v1025 = vunpack.c.l.b16 %v274
      %v1026 = vunpack.c.h.b16 %v274
      %v1027 = vunpack.c.l.b16 %v275
      %v1028 = vunpack.c.h.b16 %v275
      %v1029 = vunpack.c.l.b16 %v276
      %v1030 = vunpack.c.h.b16 %v276
      %v1031 = vunpack.c.l.b16 %v277
      %v1032 = vunpack.c.h.b16 %v277
      %v1033 = vunpack.c.l.b16 %v278
      %v1034 = vunpack.c.h.b16 %v278
      %v1035 = vunpack.c.l.b16 %v279
      %v1036 = vunpack.c.h.b16 %v279
      %v1037 = vunpack.c.l.b16 %v280
      %v1038 = vunpack.c.h.b16 %v280
      %v1039 = vunpack.c.l.b16 %v281
      %v1040 = vunpack.c.h.b16 %v281
      %v1041 = vunpack.c.l.b16 %v282
      %v1042 = vunpack.c.h.b16 %v282
      %v1043 = vunpack.c.l.b16 %v283
      %v1044 = vunpack.c.h.b16 %v283
      %v1045 = vunpack.c.l.b16 %v284
      %v1046 = vunpack.c.h.b16 %v284
      %v1047 = vunpack.c.l.b16 %v285
      %v1048 = vunpack.c.h.b16 %v285
      %v1049 = vunpack.c.l.b16 %v286
      %v1050 = vunpack.c.h.b16 %v286
      %v1051 = vunpack.c.l.b16 %v287
      %v1052 = vunpack.c.h.b16 %v287
      %v1053 = vunpack.c.l.b16 %v288
      %v1054 = vunpack.c.h.b16 %v288
      %v1055 = vunpack.c.l.b16 %v289
      %v1056 = vunpack.c.h.b16 %v289
      %v1057 = vunpack.c.l.b16 %v290
      %v1058 = vunpack.c.h.b16 %v290
      %v1059 = vunpack.c.l.b16 %v291
      %v1060 = vunpack.c.h.b16 %v291
      %v1061 = vunpack.c.l.b16 %v292
      %v1062 = vunpack.c.h.b16 %v292
      %v1063 = vunpack.c.l.b16 %v293
      %v1064 = vunpack.c.h.b16 %v293
      %v1065 = vunpack.c.l.b16 %v294
      %v1066 = vunpack.c.h.b16 %v294
      %v1067 = vunpack.c.l.b16 %v295
      %v1068 = vunpack.c.h.b16 %v295
      %v1069 = vunpack.c.l.b16 %v296
      %v1070 = vunpack.c.h.b16 %v296
      %v1071 = vunpack.c.l.b16 %v297
      %v1072 = vunpack.c.h.b16 %v297
      %v1073 = vunpack.c.l.b16 %v298
      %v1074 = vunpack.c.h.b16 %v298
      %v1075 = vunpack.c.l.b16 %v299
      %v1076 = vunpack.c.h.b16 %v299
      %v1077 = vunpack.c.l.b16 %v300
      %v1078 = vunpack.c.h.b16 %v300
      %v1079 = vunpack.c.l.b16 %v301
      %v1080 = vunpack.c.h.b16 %v301
      %v1081 = vunpack.c.l.b16 %v302
      %v1082 = vunpack.c.h.b16 %v302
      %v1083 = vunpack.c.l.b16 %v303
      %v1084 = vunpack.c.h.b16 %v303
      %v1085 = vunpack.c.l.b16 %v304
      %v1086 = vunpack.c.h.b16 %v304
      %v1087 = vunpack.c.l.b16 %v305
      %v1088 = vunpack.c.h.b16 %v305
      %v1089 = vunpack.c.l.b16 %v306
      %v1090 = vunpack.c.h.b16 %v306
      %v1091 = vunpack.c.l.b16 %v307
      %v1092 = vunpack.c.h.b16 %v307
      %v1093 = vunpack.c.l.b16 %v308
      %v1094 = vunpack.c.h.b16 %v308
      %v1095 = vunpack.c.l.b16 %v309
      %v1096 = vunpack.c.h.b16 %v309
      %v1097 = vunpack.c.l.b16 %v310
      %v1098 = vunpack.c.h.b16 %v310
      %v1099 = vunpack.c.l.b16 %v311
      %v1100 = vunpack.c.h.b16 %v311
      %v1101 = vunpack.c.l.b16 %v312
      %v1102 = vunpack.c.h.b16 %v312
      %v1103 = vunpack.c.l.b16 %v313
      %v1104 = vunpack.c.h.b16 %v313
      %v1105 = vunpack.c.l.b16 %v314
      %v1106 = vunpack.c.h.b16 %v314
      %v1107 = vunpack.c.l.b16 %v315
      %v1108 = vunpack.c.h.b16 %v315
      %v1109 = vunpack.c.l.b16 %v316
      %v1110 = vunpack.c.h.b16 %v316
      %v1111 = vunpack.c.l.b16 %v317
      %v1112 = vunpack.c.h.b16 %v317
      %v1113 = vunpack.c.l.b16 %v318
      %v1114 = vunpack.c.h.b16 %v318
      %v1115 = vunpack.c.l.b16 %v319
      %v1116 = vunpack.c.h.b16 %v319
      %v1117 = vunpack.c.l.b16 %v320
      %v1118 = vunpack.c.h.b16 %v320
      %v1119 = vunpack.c.l.b16 %v321
      %v1120 = vunpack.c.h.b16 %v321
      %v1121 = vunpack.c.l.b16 %v322
      %v1122 = vunpack.c.h.b16 %v322
      %v1123 = vunpack.c.l.b16 %v323
      %v1124 = vunpack.c.h.b16 %v323
      %v1125 = vunpack.c.l.b16 %v324
      %v1126 = vunpack.c.h.b16 %v324
      %v1127 = vunpack.c.l.b16 %v325
      %v1128 = vunpack.c.h.b16 %v325
      %v1129 = vunpack.c.l.b16 %v326
      %v1130 = vunpack.c.h.b16 %v326
      %v1131 = vunpack.c.l.b16 %v327
      %v1132 = vunpack.c.h.b16 %v327
      %v1133 = vunpack.c.l.b16 %v328
      %v1134 = vunpack.c.h.b16 %v328
      %v1135 = vunpack.c.l.b16 %v329
      %v1136 = vunpack.c.h.b16 %v329
      %v1137 = vunpack.c.l.b16 %v330
      %v1138 = vunpack.c.h.b16 %v330
      %v1139 = vunpack.c.l.b16 %v331
      %v1140 = vunpack.c.h.b16 %v331
      %v1141 = vunpack.c.l.b16 %v332
      %v1142 = vunpack.c.h.b16 %v332
      %v1143 = vunpack.c.l.b16 %v333
      %v1144 = vunpack.c.h.b16 %v333
      %v1145 = vunpack.c.l.b16 %v334
      %v1146 = vunpack.c.h.b16 %v334
      %v1147 = vunpack.c.l.b16 %v335
      %v1148 = vunpack.c.h.b16 %v335
      %v1149 = vunpack.c.l.b16 %v336
      %v1150 = vunpack.c.h.b16 %v336
      %v1151 = vunpack.c.l.b16 %v337
      %v1152 = vunpack.c.h.b16 %v337
      %v1153 = vunpack.c.l.b16 %v338
      %v1154 = vunpack.c.h.b16 %v338
      %v1155 = vunpack.c.l.b16 %v339
      %v1156 = vunpack.c.h.b16 %v339
      %v1157 = vunpack.c.l.b16 %v340
      %v1158 = vunpack.c.h.b16 %v340
      %v1159 = vunpack.c.l.b16 %v341
      %v1160 = vunpack.c.h.b16 %v341
      %v1161 = vunpack.c.l.b16 %v342
      %v1162 = vunpack.c.h.b16 %v342
      %v1163 = vunpack.c.l.b16 %v343
      %v1164 = vunpack.c.h.b16 %v343
      %v1165 = vunpack.c.l.b16 %v344
      %v1166 = vunpack.c.h.b16 %v344
      %v1167 = vunpack.c.l.b16 %v345
      %v1168 = vunpack.c.h.b16 %v345
      %v1169 = vunpack.c.l.b16 %v346
      %v1170 = vunpack.c.h.b16 %v346
      %v1171 = vunpack.c.l.b16 %v347
      %v1172 = vunpack.c.h.b16 %v347
      %v1173 = vunpack.c.l.b16 %v348
      %v1174 = vunpack.c.h.b16 %v348
      %v1175 = vunpack.c.l.b16 %v349
      %v1176 = vunpack.c.h.b16 %v349
      %v1177 = vunpack.c.l.b16 %v350
      %v1178 = vunpack.c.h.b16 %v350
      %v1179 = vunpack.c.l.b16 %v351
      %v1180 = vunpack.c.h.b16 %v351
      %v1181 = vunpack.c.l.b16 %v352
      %v1182 = vunpack.c.h.b16 %v352
      %v1183 = vunpack.c.l.b16 %v353
      %v1184 = vunpack.c.h.b16 %v353
      %v1185 = vunpack.c.l.b16 %v354
      %v1186 = vunpack.c.h.b16 %v354
      %v1187 = vunpack.c.l.b16 %v355
      %v1188 = vunpack.c.h.b16 %v355
      %v1189 = vunpack.c.l.b16 %v356
      %v1190 = vunpack.c.h.b16 %v356
      %v1191 = vunpack.c.l.b16 %v357
      %v1192 = vunpack.c.h.b16 %v357
      %v1193 = vunpack.c.l.b16 %v358
      %v1194 = vunpack.c.h.b16 %v358
      %v1195 = vunpack.c.l.b16 %v359
      %v1196 = vunpack.c.h.b16 %v359
      %v1197 = vunpack.c.l.b16 %v360
      %v1198 = vunpack.c.h.b16 %v360
      %v1199 = vunpack.c.l.b16 %v361
      %v1200 = vunpack.c.h.b16 %v361
      %v1201 = vunpack.c.l.b16 %v362
      %v1202 = vunpack.c.h.b16 %v362
      %v1203 = vunpack.c.l.b16 %v363
      %v1204 = vunpack.c.h.b16 %v363
      %v1205 = vunpack.c.l.b16 %v364
      %v1206 = vunpack.c.h.b16 %v364
      %v1207 = vunpack.c.l.b16 %v365
      %v1208 = vunpack.c.h.b16 %v365
      %v1209 = vunpack.c.l.b16 %v366
      %v1210 = vunpack.c.h.b16 %v366
      %v1211 = vunpack.c.l.b16 %v367
      %v1212 = vunpack.c.h.b16 %v367
      %v1213 = vunpack.c.l.b16 %v368
      %v1214 = vunpack.c.h.b16 %v368
      %v1215 = vunpack.c.l.b16 %v369
      %v1216 = vunpack.c.h.b16 %v369
      %v1217 = vunpack.c.l.b16 %v370
      %v1218 = vunpack.c.h.b16 %v370
      %v1219 = vunpack.c.l.b16 %v371
      %v1220 = vunpack.c.h.b16 %v371
      %v1221 = vunpack.c.l.b16 %v372
      %v1222 = vunpack.c.h.b16 %v372
      %v1223 = vunpack.c.l.b16 %v373
      %v1224 = vunpack.c.h.b16 %v373
      %v1225 = vunpack.c.l.b16 %v374
      %v1226 = vunpack.c.h.b16 %v374
      %v1227 = vunpack.c.l.b16 %v375
      %v1228 = vunpack.c.h.b16 %v375
      %v1229 = vunpack.c.l.b16 %v376
      %v1230 = vunpack.c.h.b16 %v376
      %v1231 = vunpack.c.l.b16 %v377
      %v1232 = vunpack.c.h.b16 %v377
      %v1233 = vunpack.c.l.b16 %v378
      %v1234 = vunpack.c.h.b16 %v378
      %v1235 = vunpack.c.l.b16 %v379
      %v1236 = vunpack.c.h.b16 %v379
      %v1237 = vunpack.c.l.b16 %v380
      %v1238 = vunpack.c.h.b16 %v380
      %v1239 = vunpack.c.l.b16 %v381
      %v1240 = vunpack.c.h.b16 %v381
      %v1241 = vunpack.c.l.b16 %v382
      %v1242 = vunpack.c.h.b16 %v382
      %v1243 = vunpack.c.l.b16 %v383
      %v1244 = vunpack.c.h.b16 %v383
      %v1245 = vunpack.c.l.b16 %v384
      %v1246 = vunpack.c.h.b16 %v384
      %v1247 = vunpack.c.l.b16 %v385
      %v1248 = vunpack.c.h.b16 %v385
      %v1249 = vunpack.c.l.b16 %v386
      %v1250 = vunpack.c.h.b16 %v386
      %v1251 = vunpack.c.l.b16 %v387
      %v1252 = vunpack.c.h.b16 %v387
      %v1253 = vunpack.c.l.b16 %v388
      %v1254 = vunpack.c.h.b16 %v388
      %v1255 = vunpack.c.l.b16 %v389
      %v1256 = vunpack.c.h.b16 %v389
      %v1257 = vunpack.c.l.b16 %v390
      %v1258 = vunpack.c.h.b16 %v390
      %v1259 = vunpack.c.l.b16 %v391
      %v1260 = vunpack.c.h.b16 %v391
      %v1261 = vunpack.c.l.b16 %v392
      %v1262 = vunpack.c.h.b16 %v392
      %v1263 = vunpack.c.l.b16 %v393
      %v1264 = vunpack.c.h.b16 %v393
      %v1265 = vunpack.c.l.b16 %v394
      %v1266 = vunpack.c.h.b16 %v394
      %v1267 = vunpack.c.l.b16 %v395
      %v1268 = vunpack.c.h.b16 %v395
      %v1269 = vunpack.c.l.b16 %v396
      %v1270 = vunpack.c.h.b16 %v396
      %v1271 = vunpack.c.l.b16 %v397
      %v1272 = vunpack.c.h.b16 %v397
      %v1273 = vunpack.c.l.b16 %v398
      %v1274 = vunpack.c.h.b16 %v398
      %v1275 = vunpack.c.l.b16 %v399
      %v1276 = vunpack.c.h.b16 %v399
      %v1277 = vunpack.c.l.b16 %v400
      %v1278 = vunpack.c.h.b16 %v400
      %v1279 = vunpack.c.l.b16 %v401
      %v1280 = vunpack.c.h.b16 %v401
      %v1281 = vunpack.c.l.b16 %v402
      %v1282 = vunpack.c.h.b16 %v402
      %v1283 = vunpack.c.l.b16 %v403
      %v1284 = vunpack.c.h.b16 %v403
      %v1285 = vunpack.c.l.b16 %v404
      %v1286 = vunpack.c.h.b16 %v404
      %v1287 = vunpack.c.l.b16 %v405
      %v1288 = vunpack.c.h.b16 %v405
      %v1289 = vunpack.c.l.b16 %v406
      %v1290 = vunpack.c.h.b16 %v406
      %v1291 = vunpack.c.l.b16 %v407
      %v1292 = vunpack.c.h.b16 %v407
      %v1293 = vunpack.c.l.b16 %v408
      %v1294 = vunpack.c.h.b16 %v408
      %v1295 = vunpack.c.l.b16 %v409
      %v1296 = vunpack.c.h.b16 %v409
      %v1297 = vunpack.c.l.b16 %v410
      %v1298 = vunpack.c.h.b16 %v410
      %v1299 = vunpack.c.l.b16 %v411
      %v1300 = vunpack.c.h.b16 %v411
      %v1301 = vunpack.c.l.b16 %v412
      %v1302 = vunpack.c.h.b16 %v412
      %v1303 = vunpack.c.l.b16 %v413
      %v1304 = vunpack.c.h.b16 %v413
      %v1305 = vunpack.c.l.b16 %v414
      %v1306 = vunpack.c.h.b16 %v414
      %v1307 = vunpack.c.l.b16 %v415
      %v1308 = vunpack.c.h.b16 %v415
      %v1309 = vunpack.c.l.b16 %v416
      %v1310 = vunpack.c.h.b16 %v416
      %v1311 = vunpack.c.l.b16 %v417
      %v1312 = vunpack.c.h.b16 %v417
      %v1313 = vunpack.c.l.b16 %v418
      %v1314 = vunpack.c.h.b16 %v418
      %v1315 = vunpack.c.l.b16 %v419
      %v1316 = vunpack.c.h.b16 %v419
      %v1317 = vunpack.c.l.b16 %v420
      %v1318 = vunpack.c.h.b16 %v420
      %v1319 = vunpack.c.l.b16 %v421
      %v1320 = vunpack.c.h.b16 %v421
      %v1321 = vunpack.c.l.b16 %v422
      %v1322 = vunpack.c.h.b16 %v422
      %v1323 = vunpack.c.l.b16 %v423
      %v1324 = vunpack.c.h.b16 %v423
      %v1325 = vunpack.c.l.b16 %v424
      %v1326 = vunpack.c.h.b16 %v424
      %v1327 = vunpack.c.l.b16 %v425
      %v1328 = vunpack.c.h.b16 %v425
      %v1329 = vunpack.c.l.b16 %v426
      %v1330 = vunpack.c.h.b16 %v426
      %v1331 = vunpack.c.l.b16 %v427
      %v1332 = vunpack.c.h.b16 %v427
      %v1333 = vunpack.c.l.b16 %v428
      %v1334 = vunpack.c.h.b16 %v428
      %v1335 = vunpack.c.l.b16 %v429
      %v1336 = vunpack.c.h.b16 %v429
      %v1337 = vunpack.c.l.b16 %v430
      %v1338 = vunpack.c.h.b16 %v430
      %v1339 = vunpack.c.l.b16 %v431
      %v1340 = vunpack.c.h.b16 %v431
      %v1341 = vunpack.c.l.b16 %v432
      %v1342 = vunpack.c.h.b16 %v432
      %v1343 = vunpack.c.l.b16 %v433
      %v1344 = vunpack.c.h.b16 %v433
      %v1345 = vunpack.c.l.b16 %v434
      %v1346 = vunpack.c.h.b16 %v434
      %v1347 = vunpack.c.l.b16 %v435
      %v1348 = vunpack.c.h.b16 %v435
      %v1349 = vunpack.c.l.b16 %v436
      %v1350 = vunpack.c.h.b16 %v436
      %v1351 = vunpack.c.l.b16 %v437
      %v1352 = vunpack.c.h.b16 %v437
      %v1353 = vunpack.c.l.b16 %v438
      %v1354 = vunpack.c.h.b16 %v438
      %v1355 = vunpack.c.l.b16 %v439
      %v1356 = vunpack.c.h.b16 %v439
      %v1357 = vunpack.c.l.b16 %v440
      %v1358 = vunpack.c.h.b16 %v440
      %v1359 = vunpack.c.l.b16 %v441
      %v1360 = vunpack.c.h.b16 %v441
      %v1361 = vunpack.c.l.b16 %v442
      %v1362 = vunpack.c.h.b16 %v442
      %v1363 = vunpack.c.l.b16 %v443
      %v1364 = vunpack.c.h.b16 %v443
      %v1365 = vunpack.c.l.b16 %v444
      %v1366 = vunpack.c.h.b16 %v444
      %v1367 = vunpack.c.l.b16 %v445
      %v1368 = vunpack.c.h.b16 %v445
      %v1369 = vunpack.c.l.b16 %v446
      %v1370 = vunpack.c.h.b16 %v446
      %v1371 = vunpack.c.l.b16 %v447
      %v1372 = vunpack.c.h.b16 %v447
      %v1373 = vunpack.c.l.b16 %v448
      %v1374 = vunpack.c.h.b16 %v448
      %v1375 = vunpack.c.l.b16 %v449
      %v1376 = vunpack.c.h.b16 %v449
      %v1377 = vunpack.c.l.b16 %v450
      %v1378 = vunpack.c.h.b16 %v450
      %v1379 = vunpack.c.l.b16 %v451
      %v1380 = vunpack.c.h.b16 %v451
      %v1381 = vunpack.c.l.b16 %v452
      %v1382 = vunpack.c.h.b16 %v452
      %v1383 = vunpack.c.l.b16 %v453
      %v1384 = vunpack.c.h.b16 %v453
      %v1385 = vunpack.c.l.b16 %v454
      %v1386 = vunpack.c.h.b16 %v454
      %v1387 = vunpack.c.l.b16 %v455
      %v1388 = vunpack.c.h.b16 %v455
      %v1389 = vunpack.c.l.b16 %v456
      %v1390 = vunpack.c.h.b16 %v456
      %v1391 = vunpack.c.l.b16 %v457
      %v1392 = vunpack.c.h.b16 %v457
      %v1393 = vunpack.c.l.b16 %v458
      %v1394 = vunpack.c.h.b16 %v458
      %v1395 = vunpack.c.l.b16 %v459
      %v1396 = vunpack.c.h.b16 %v459
      %v1397 = vunpack.c.l.b16 %v460
      %v1398 = vunpack.c.h.b16 %v460
      %v1399 = vunpack.c.l.b16 %v461
      %v1400 = vunpack.c.h.b16 %v461
      %v1401 = vunpack.c.l.b16 %v462
      %v1402 = vunpack.c.h.b16 %v462
      %v1403 = vunpack.c.l.b16 %v463
      %v1404 = vunpack.c.h.b16 %v463
      %v1405 = vunpack.c.l.b16 %v464
      %v1406 = vunpack.c.h.b16 %v464
      %v1407 = vunpack.c.l.b16 %v465
      %v1408 = vunpack.c.h.b16 %v465
      %v1409 = vunpack.c.l.b16 %v466
      %v1410 = vunpack.c.h.b16 %v466
      %v1411 = vunpack.c.l.b16 %v467
      %v1412 = vunpack.c.h.b16 %v467
      %v1413 = vunpack.c.l.b16 %v468
      %v1414 = vunpack.c.h.b16 %v468
      %v1415 = vunpack.c.l.b16 %v469
      %v1416 = vunpack.c.h.b16 %v469
      %v1417 = vunpack.c.l.b16 %v470
      %v1418 = vunpack.c.h.b16 %v470
      %v1419 = vunpack.c.l.b16 %v471
      %v1420 = vunpack.c.h.b16 %v471
      %v1421 = vunpack.c.l.b16 %v472
      %v1422 = vunpack.c.h.b16 %v472
      %v1423 = vunpack.c.l.b16 %v473
      %v1424 = vunpack.c.h.b16 %v473
      %v1425 = vunpack.c.l.b16 %v474
      %v1426 = vunpack.c.h.b16 %v474
      %v1427 = vunpack.c.l.b16 %v475
      %v1428 = vunpack.c.h.b16 %v475
      %v1429 = vunpack.c.l.b16 %v476
      %v1430 = vunpack.c.h.b16 %v476
      %v1431 = vunpack.c.l.b16 %v477
      %v1432 = vunpack.c.h.b16 %v477
      %v1433 = vunpack.c.l.b16 %v478
      %v1434 = vunpack.c.h.b16 %v478
      %v1435 = vpack.c.b16 %v865, %v859
      %v1436 = vpack.c.b16 %v866, %v860
      %v1437 = vpack.c.b16 %v867, %v861
      %v1438 = vpack.c.b16 %v868, %v862
      %v1439 = vpack.c.b16 %v869, %v863
      %v1440 = vpack.c.b16 %v870, %v864
      %v1441 = vpack.c.b16 %v877, %v871
      %v1442 = vpack.c.b16 %v878, %v872
      %v1443 = vpack.c.b16 %v879, %v873
      %v1444 = vpack.c.b16 %v880, %v874
      %v1445 = vpack.c.b16 %v881, %v875
      %v1446 = vpack.c.b16 %v882, %v876
      %v1447 = vpack.c.b16 %v889, %v883
      %v1448 = vpack.c.b16 %v890, %v884
      %v1449 = vpack.c.b16 %v891, %v885
      %v1450 = vpack.c.b16 %v892, %v886
      %v1451 = vpack.c.b16 %v893, %v887
      %v1452 = vpack.c.b16 %v894, %v888
      %v1453 = vpack.c.b16 %v901, %v895
      %v1454 = vpack.c.b16 %v902, %v896
      %v1455 = vpack.c.b16 %v903, %v897
      %v1456 = vpack.c.b16 %v904, %v898
      %v1457 = vpack.c.b16 %v905, %v899
      %v1458 = vpack.c.b16 %v906, %v900
      %v1459 = vpack.c.b16 %v913, %v907
      %v1460 = vpack.c.b16 %v914, %v908
      %v1461 = vpack.c.b16 %v915, %v909
      %v1462 = vpack.c.b16 %v916, %v910
      %v1463 = vpack.c.b16 %v917, %v911
      %v1464 = vpack.c.b16 %v918, %v912
      %v1465 = vpack.c.b16 %v925, %v919
      %v1466 = vpack.c.b16 %v926, %v920
      %v1467 = vpack.c.b16 %v927, %v921
      %v1468 = vpack.c.b16 %v928, %v922
      %v1469 = vpack.c.b16 %v929, %v923
      %v1470 = vpack.c.b16 %v930, %v924
      %v1471 = vpack.c.b16 %v937, %v931
      %v1472 = vpack.c.b16 %v938, %v932
      %v1473 = vpack.c.b16 %v939, %v933
      %v1474 = vpack.c.b16 %v940, %v934
      %v1475 = vpack.c.b16 %v941, %v935
      %v1476 = vpack.c.b16 %v942, %v936
      %v1477 = vpack.c.b16 %v949, %v943
      %v1478 = vpack.c.b16 %v950, %v944
      %v1479 = vpack.c.b16 %v951, %v945
      %v1480 = vpack.c.b16 %v952, %v946
      %v1481 = vpack.c.b16 %v953, %v947
      %v1482 = vpack.c.b16 %v954, %v948
      %v1483 = vpack.c.b16 %v961, %v955
      %v1484 = vpack.c.b16 %v962, %v956
      %v1485 = vpack.c.b16 %v963, %v957
      %v1486 = vpack.c.b16 %v964, %v958
      %v1487 = vpack.c.b16 %v965, %v959
      %v1488 = vpack.c.b16 %v966, %v960
      %v1489 = vpack.c.b16 %v973, %v967
      %v1490 = vpack.c.b16 %v974, %v968
      %v1491 = vpack.c.b16 %v975, %v969
      %v1492 = vpack.c.b16 %v976, %v970
      %v1493 = vpack.c.b16 %v977, %v971
      %v1494 = vpack.c.b16 %v978, %v972
      %v1495 = vpack.c.b16 %v985, %v979
      %v1496 = vpack.c.b16 %v986, %v980
      %v1497 = vpack.c.b16 %v987, %v981
      %v1498 = vpack.c.b16 %v988, %v982
      %v1499 = vpack.c.b16 %v989, %v983
      %v1500 = vpack.c.b16 %v990, %v984
      %v1501 = vpack.c.b16 %v997, %v991
      %v1502 = vpack.c.b16 %v998, %v992
      %v1503 = vpack.c.b16 %v999, %v993
      %v1504 = vpack.c.b16 %v1000, %v994
      %v1505 = vpack.c.b16 %v1001, %v995
      %v1506 = vpack.c.b16 %v1002, %v996
      %v1507 = vpack.c.b16 %v1009, %v1003
      %v1508 = vpack.c.b16 %v1010, %v1004
      %v1509 = vpack.c.b16 %v1011, %v1005
      %v1510 = vpack.c.b16 %v1012, %v1006
      %v1511 = vpack.c.b16 %v1013, %v1007
      %v1512 = vpack.c.b16 %v1014, %v1008
      %v1513 = vpack.c.b16 %v1021, %v1015
      %v1514 = vpack.c.b16 %v1022, %v1016
      %v1515 = vpack.c.b16 %v1023, %v1017
      %v1516 = vpack.c.b16 %v1024, %v1018
      %v1517 = vpack.c.b16 %v1025, %v1019
      %v1518 = vpack.c.b16 %v1026, %v1020
      %v1519 = vpack.c.b16 %v1033, %v1027
      %v1520 = vpack.c.b16 %v1034, %v1028
      %v1521 = vpack.c.b16 %v1035, %v1029
      %v1522 = vpack.c.b16 %v1036, %v1030
      %v1523 = vpack.c.b16 %v1037, %v1031
      %v1524 = vpack.c.b16 %v1038, %v1032
      %v1525 = vpack.c.b16 %v1045, %v1039
      %v1526 = vpack.c.b16 %v1046, %v1040
      %v1527 = vpack.c.b16 %v1047, %v1041
      %v1528 = vpack.c.b16 %v1048, %v1042
      %v1529 = vpack.c.b16 %v1049, %v1043
      %v1530 = vpack.c.b16 %v1050, %v1044
      %v1531 = vpack.c.b16 %v1057, %v1051
      %v1532 = vpack.c.b16 %v1058, %v1052
      %v1533 = vpack.c.b16 %v1059, %v1053
      %v1534 = vpack.c.b16 %v1060, %v1054
      %v1535 = vpack.c.b16 %v1061, %v1055
      %v1536 = vpack.c.b16 %v1062, %v1056
      %v1537 = vpack.c.b16 %v1069, %v1063
      %v1538 = vpack.c.b16 %v1070, %v1064
      %v1539 = vpack.c.b16 %v1071, %v1065
      %v1540 = vpack.c.b16 %v1072, %v1066
      %v1541 = vpack.c.b16 %v1073, %v1067
      %v1542 = vpack.c.b16 %v1074, %v1068
      %v1543 = vpack.c.b16 %v1081, %v1075
      %v1544 = vpack.c.b16 %v1082, %v1076
      %v1545 = vpack.c.b16 %v1083, %v1077
      %v1546 = vpack.c.b16 %v1084, %v1078
      %v1547 = vpack.c.b16 %v1085, %v1079
      %v1548 = vpack.c.b16 %v1086, %v1080
      %v1549 = vpack.c.b16 %v1093, %v1087
      %v1550 = vpack.c.b16 %v1094, %v1088
      %v1551 = vpack.c.b16 %v1095, %v1089
      %v1552 = vpack.c.b16 %v1096, %v1090
      %v1553 = vpack.c.b16 %v1097, %v1091
      %v1554 = vpack.c.b16 %v1098, %v1092
      %v1555 = vpack.c.b16 %v1105, %v1099
      %v1556 = vpack.c.b16 %v1106, %v1100
      %v1557 = vpack.c.b16 %v1107, %v1101
      %v1558 = vpack.c.b16 %v1108, %v1102
      %v1559 = vpack.c.b16 %v1109, %v1103
      %v1560 = vpack.c.b16 %v1110, %v1104
      %v1561 = vpack.c.b16 %v1117, %v1111
      %v1562 = vpack.c.b16 %v1118, %v1112
      %v1563 = vpack.c.b16 %v1119, %v1113
      %v1564 = vpack.c.b16 %v1120, %v1114
      %v1565 = vpack.c.b16 %v1121, %v1115
      %v1566 = vpack.c.b16 %v1122, %v1116
      %v1567 = vpack.c.b16 %v1129, %v1123
      %v1568 = vpack.c.b16 %v1130, %v1124
      %v1569 = vpack.c.b16 %v1131, %v1125
      %v1570 = vpack.c.b16 %v1132, %v1126
      %v1571 = vpack.c.b16 %v1133, %v1127
      %v1572 = vpack.c.b16 %v1134, %v1128
      %v1573 = vpack.c.b16 %v1141, %v1135
      %v1574 = vpack.c.b16 %v1142, %v1136
      %v1575 = vpack.c.b16 %v1143, %v1137
      %v1576 = vpack.c.b16 %v1144, %v1138
      %v1577 = vpack.c.b16 %v1145, %v1139
      %v1578 = vpack.c.b16 %v1146, %v1140
      %v1579 = vpack.c.b16 %v1153, %v1147
      %v1580 = vpack.c.b16 %v1154, %v1148
      %v1581 = vpack.c.b16 %v1155, %v1149
      %v1582 = vpack.c.b16 %v1156, %v1150
      %v1583 = vpack.c.b16 %v1157, %v1151
      %v1584 = vpack.c.b16 %v1158, %v1152
      %v1585 = vpack.c.b16 %v1165, %v1159
      %v1586 = vpack.c.b16 %v1166, %v1160
      %v1587 = vpack.c.b16 %v1167, %v1161
      %v1588 = vpack.c.b16 %v1168, %v1162
      %v1589 = vpack.c.b16 %v1169, %v1163
      %v1590 = vpack.c.b16 %v1170, %v1164
      %v1591 = vpack.c.b16 %v1177, %v1171
      %v1592 = vpack.c.b16 %v1178, %v1172
      %v1593 = vpack.c.b16 %v1179, %v1173
      %v1594 = vpack.c.b16 %v1180, %v1174
      %v1595 = vpack.c.b16 %v1181, %v1175
      %v1596 = vpack.c.b16 %v1182, %v1176
      %v1597 = vpack.c.b16 %v1189, %v1183
      %v1598 = vpack.c.b16 %v1190, %v1184
      %v1599 = vpack.c.b16 %v1191, %v1185
      %v1600 = vpack.c.b16 %v1192, %v1186
      %v1601 = vpack.c.b16 %v1193, %v1187
      %v1602 = vpack.c.b16 %v1194, %v1188
      %v1603 = vpack.c.b16 %v1201, %v1195
      %v1604 = vpack.c.b16 %v1202, %v1196
      %v1605 = vpack.c.b16 %v1203, %v1197
      %v1606 = vpack.c.b16 %v1204, %v1198
      %v1607 = vpack.c.b16 %v1205, %v1199
      %v1608 = vpack.c.b16 %v1206, %v1200
      %v1609 = vpack.c.b16 %v1213, %v1207
      %v1610 = vpack.c.b16 %v1214, %v1208
      %v1611 = vpack.c.b16 %v1215, %v1209
      %v1612 = vpack.c.b16 %v1216, %v1210
      %v1613 = vpack.c.b16 %v1217, %v1211
      %v1614 = vpack.c.b16 %v1218, %v1212
      %v1615 = vpack.c.b16 %v1225, %v1219
      %v1616 = vpack.c.b16 %v1226, %v1220
      %v1617 = vpack.c.b16 %v1227, %v1221
      %v1618 = vpack.c.b16 %v1228, %v1222
      %v1619 = vpack.c.b16 %v1229, %v1223
      %v1620 = vpack.c.b16 %v1230, %v1224
      %v1621 = vpack.c.b16 %v1237, %v1231
      %v1622 = vpack.c.b16 %v1238, %v1232
      %v1623 = vpack.c.b16 %v1239, %v1233
      %v1624 = vpack.c.b16 %v1240, %v1234
      %v1625 = vpack.c.b16 %v1241, %v1235
      %v1626 = vpack.c.b16 %v1242, %v1236
      %v1627 = vpack.c.b16 %v1249, %v1243
      %v1628 = vpack.c.b16 %v1250, %v1244
      %v1629 = vpack.c.b16 %v1251, %v1245
      %v1630 = vpack.c.b16 %v1252, %v1246
      %v1631 = vpack.c.b16 %v1253, %v1247
      %v1632 = vpack.c.b16 %v1254, %v1248
      %v1633 = vpack.c.b16 %v1261, %v1255
      %v1634 = vpack.c.b16 %v1262, %v1256
      %v1635 = vpack.c.b16 %v1263, %v1257
      %v1636 = vpack.c.b16 %v1264, %v1258
      %v1637 = vpack.c.b16 %v1265, %v1259
      %v1638 = vpack.c.b16 %v1266, %v1260
      %v1639 = vpack.c.b16 %v1273, %v1267
      %v1640 = vpack.c.b16 %v1274, %v1268
      %v1641 = vpack.c.b16 %v1275, %v1269
      %v1642 = vpack.c.b16 %v1276, %v1270
      %v1643 = vpack.c.b16 %v1277, %v1271
      %v1644 = vpack.c.b16 %v1278, %v1272
      %v1645 = vpack.c.b16 %v1285, %v1279
      %v1646 = vpack.c.b16 %v1286, %v1280
      %v1647 = vpack.c.b16 %v1287, %v1281
      %v1648 = vpack.c.b16 %v1288, %v1282
      %v1649 = vpack.c.b16 %v1289, %v1283
      %v1650 = vpack.c.b16 %v1290, %v1284
      %v1651 = vpack.c.b16 %v1297, %v1291
      %v1652 = vpack.c.b16 %v1298, %v1292
      %v1653 = vpack.c.b16 %v1299, %v1293
      %v1654 = vpack.c.b16 %v1300, %v1294
      %v1655 = vpack.c.b16 %v1301, %v1295
      %v1656 = vpack.c.b16 %v1302, %v1296
      %v1657 = vpack.c.b16 %v1309, %v1303
      %v1658 = vpack.c.b16 %v1310, %v1304
      %v1659 = vpack.c.b16 %v1311, %v1305
      %v1660 = vpack.c.b16 %v1312, %v1306
      %v1661 = vpack.c.b16 %v1313, %v1307
      %v1662 = vpack.c.b16 %v1314, %v1308
      %v1663 = vpack.c.b16 %v1321, %v1315
      %v1664 = vpack.c.b16 %v1322, %v1316
      %v1665 = vpack.c.b16 %v1323, %v1317
      %v1666 = vpack.c.b16 %v1324, %v1318
      %v1667 = vpack.c.b16 %v1325, %v1319
      %v1668 = vpack.c.b16 %v1326, %v1320
      %v1669 = vpack.c.b16 %v1333, %v1327
      %v1670 = vpack.c.b16 %v1334, %v1328
      %v1671 = vpack.c.b16 %v1335, %v1329
      %v1672 = vpack.c.b16 %v1336, %v1330
      %v1673 = vpack.c.b16 %v1337, %v1331
      %v1674 = vpack.c.b16 %v1338, %v1332
      %v1675 = vpack.c.b16 %v1345, %v1339
      %v1676 = vpack.c.b16 %v1346, %v1340
      %v1677 = vpack.c.b16 %v1347, %v1341
      %v1678 = vpack.c.b16 %v1348, %v1342
      %v1679 = vpack.c.b16 %v1349, %v1343
      %v1680 = vpack.c.b16 %v1350, %v1344
      %v1681 = vpack.c.b16 %v1357, %v1351
      %v1682 = vpack.c.b16 %v1358, %v1352
      %v1683 = vpack.c.b16 %v1359, %v1353
      %v1684 = vpack.c.b16 %v1360, %v1354
      %v1685 = vpack.c.b16 %v1361, %v1355
      %v1686 = vpack.c.b16 %v1362, %v1356
      %v1687 = vpack.c.b16 %v1369, %v1363
      %v1688 = vpack.c.b16 %v1370, %v1364
      %v1689 = vpack.c.b16 %v1371, %v1365
      %v1690 = vpack.c.b16 %v1372, %v1366
      %v1691 = vpack.c.b16 %v1373, %v1367
      %v1692 = vpack.c.b16 %v1374, %v1368
      %v1693 = vpack.c.b16 %v1381, %v1375
      %v1694 = vpack.c.b16 %v1382, %v1376
      %v1695 = vpack.c.b16 %v1383, %v1377
      %v1696 = vpack.c.b16 %v1384, %v1378
      %v1697 = vpack.c.b16 %v1385, %v1379
      %v1698 = vpack.c.b16 %v1386, %v1380
      %v1699 = vpack.c.b16 %v1393, %v1387
      %v1700 = vpack.c.b16 %v1394, %v1388
      %v1701 = vpack.c.b16 %v1395, %v1389
      %v1702 = vpack.c.b16 %v1396, %v1390
      %v1703 = vpack.c.b16 %v1397, %v1391
      %v1704 = vpack.c.b16 %v1398, %v1392
      %v1705 = vpack.c.b16 %v1405, %v1399
      %v1706 = vpack.c.b16 %v1406, %v1400
      %v1707 = vpack.c.b16 %v1407, %v1401
      %v1708 = vpack.c.b16 %v1408, %v1402
      %v1709 = vpack.c.b16 %v1409, %v1403
      %v1710 = vpack.c.b16 %v1410, %v1404
      %v1711 = vpack.c.b16 %v1417, %v1411
      %v1712 = vpack.c.b16 %v1418, %v1412
      %v1713 = vpack.c.b16 %v1419, %v1413
      %v1714 = vpack.c.b16 %v1420, %v1414
      %v1715 = vpack.c.b16 %v1421, %v1415
      %v1716 = vpack.c.b16 %v1422, %v1416
      %v1717 = vpack.c.b16 %v1429, %v1423
      %v1718 = vpack.c.b16 %v1430, %v1424
      %v1719 = vpack.c.b16 %v1431, %v1425
      %v1720 = vpack.c.b16 %v1432, %v1426
      %v1721 = vpack.c.b16 %v1433, %v1427
      %v1722 = vpack.c.b16 %v1434, %v1428
      %2011 = vmatprep.subr.bf16.mxu0 %v1478
      %2012 = vmatpush1.bf16.msra.mxu0 %v1477
      %2013 = vmatprep.subr.bf16.mxu0 %v1472
      %2014 = vmatpush1.bf16.msra.mxu0 %v1471
      %2015 = vmatprep.subr.bf16.mxu0 %v1466
      %2016 = vmatpush1.bf16.msra.mxu0 %v1465
      %2017 = vmatprep.subr.bf16.mxu0 %v1460
      %2018 = vmatpush1.bf16.msra.mxu0 %v1459
      %2019 = vmatprep.subr.bf16.mxu0 %v1454
      %2020 = vmatpush1.bf16.msra.mxu0 %v1453
      %2021 = vmatprep.subr.bf16.mxu0 %v1448
      %2022 = vmatpush1.bf16.msra.mxu0 %v1447
      %2023 = vmatprep.subr.bf16.mxu0 %v1442
      %2024 = vmatpush1.bf16.msra.mxu0 %v1441
      %2025 = vmatprep.subr.bf16.mxu0 %v1436
      %2026 = vmatpush1.bf16.msra.mxu0 %v1435
      %2027 = vmatprep.subr.bf16.mxu0 %v1526
      %2028 = vmatpush2.bf16.msra.mxu0 %v1525
      %2029 = vmatprep.subr.bf16.mxu0 %v1520
      %2030 = vmatpush2.bf16.msra.mxu0 %v1519
      %2031 = vmatprep.subr.bf16.mxu0 %v1514
      %2032 = vmatpush2.bf16.msra.mxu0 %v1513
      %2033 = vmatprep.subr.bf16.mxu0 %v1508
      %2034 = vmatpush2.bf16.msra.mxu0 %v1507
      %2035 = vmatprep.subr.bf16.mxu0 %v1502
      %2036 = vmatpush2.bf16.msra.mxu0 %v1501
      %2037 = vmatprep.subr.bf16.mxu0 %v1496
      %2038 = vmatpush2.bf16.msra.mxu0 %v1495
      %2039 = vmatprep.subr.bf16.mxu0 %v1490
      %2040 = vmatpush2.bf16.msra.mxu0 %v1489
      %2041 = vmatprep.subr.bf16.mxu0 %v1484
      %2042 = vmatpush2.bf16.msra.mxu0 %v1483
      %2043 = vmatprep.mubr.bf16.mxu0 %v548
      %2044 = vmatmul.mubr.bf16.gmra.mxu0 %v547
      %v2045 = vpop.f32.mrf.mxu0
      %v2046 = vadd.f32 %v484, %v2045
      %v2047 = vpop.f32.mrf.mxu0
      %v2048 = vadd.f32 %v488, %v2047
      %v2049 = vpop.f32.mrf.mxu0
      %v2050 = vadd.f32 %v484, %v2049
      %v2051 = vpop.f32.mrf.mxu0
      %v2052 = vadd.f32 %v488, %v2051
      %2053 = vmatprep.mubr.bf16.mxu0 %v554
      %2054 = vmatmul.mubr.bf16.gmra.mxu0 %v553
      %v2055 = vpop.f32.mrf.mxu0
      %v2056 = vadd.f32 %v484, %v2055
      %v2057 = vpop.f32.mrf.mxu0
      %v2058 = vadd.f32 %v488, %v2057
      %v2059 = vpop.f32.mrf.mxu0
      %v2060 = vadd.f32 %v484, %v2059
      %v2061 = vpop.f32.mrf.mxu0
      %v2062 = vadd.f32 %v488, %v2061
      %2063 = vdwg.mxu0
      %2064 = vmatprep.subr.bf16.mxu0 %v1574
      %2065 = vmatpush1.bf16.msra.mxu0 %v1573
      %2066 = vmatprep.subr.bf16.mxu0 %v1568
      %2067 = vmatpush1.bf16.msra.mxu0 %v1567
      %2068 = vmatprep.subr.bf16.mxu0 %v1562
      %2069 = vmatpush1.bf16.msra.mxu0 %v1561
      %2070 = vmatprep.subr.bf16.mxu0 %v1556
      %2071 = vmatpush1.bf16.msra.mxu0 %v1555
      %2072 = vmatprep.subr.bf16.mxu0 %v1550
      %2073 = vmatpush1.bf16.msra.mxu0 %v1549
      %2074 = vmatprep.subr.bf16.mxu0 %v1544
      %2075 = vmatpush1.bf16.msra.mxu0 %v1543
      %2076 = vmatprep.subr.bf16.mxu0 %v1538
      %2077 = vmatpush1.bf16.msra.mxu0 %v1537
      %2078 = vmatprep.subr.bf16.mxu0 %v1532
      %2079 = vmatpush1.bf16.msra.mxu0 %v1531
      %2080 = vmatprep.subr.bf16.mxu0 %v1622
      %2081 = vmatpush2.bf16.msra.mxu0 %v1621
      %2082 = vmatprep.subr.bf16.mxu0 %v1616
      %2083 = vmatpush2.bf16.msra.mxu0 %v1615
      %2084 = vmatprep.subr.bf16.mxu0 %v1610
      %2085 = vmatpush2.bf16.msra.mxu0 %v1609
      %2086 = vmatprep.subr.bf16.mxu0 %v1604
      %2087 = vmatpush2.bf16.msra.mxu0 %v1603
      %2088 = vmatprep.subr.bf16.mxu0 %v1598
      %2089 = vmatpush2.bf16.msra.mxu0 %v1597
      %2090 = vmatprep.subr.bf16.mxu0 %v1592
      %2091 = vmatpush2.bf16.msra.mxu0 %v1591
      %2092 = vmatprep.subr.bf16.mxu0 %v1586
      %2093 = vmatpush2.bf16.msra.mxu0 %v1585
      %2094 = vmatprep.subr.bf16.mxu0 %v1580
      %2095 = vmatpush2.bf16.msra.mxu0 %v1579
      %2096 = vmatprep.mubr.bf16.mxu0 %v550
      %2097 = vmatmul.mubr.bf16.gmra.mxu0 %v549
      %v2098 = vpop.f32.mrf.mxu0
      %v2099 = vadd.f32 %v2046, %v2098
      %v2100 = vpop.f32.mrf.mxu0
      %v2101 = vadd.f32 %v2048, %v2100
      %v2102 = vpop.f32.mrf.mxu0
      %v2103 = vadd.f32 %v2050, %v2102
      %v2104 = vpop.f32.mrf.mxu0
      %v2105 = vadd.f32 %v2052, %v2104
      %2106 = vmatprep.mubr.bf16.mxu0 %v556
      %2107 = vmatmul.mubr.bf16.gmra.mxu0 %v555
      %v2108 = vpop.f32.mrf.mxu0
      %v2109 = vadd.f32 %v2056, %v2108
      %v2110 = vpop.f32.mrf.mxu0
      %v2111 = vadd.f32 %v2058, %v2110
      %v2112 = vpop.f32.mrf.mxu0
      %v2113 = vadd.f32 %v2060, %v2112
      %v2114 = vpop.f32.mrf.mxu0
      %v2115 = vadd.f32 %v2062, %v2114
      %2116 = vdwg.mxu0
      %2117 = vmatprep.subr.bf16.mxu0 %v1670
      %2118 = vmatpush1.bf16.msra.mxu0 %v1669
      %2119 = vmatprep.subr.bf16.mxu0 %v1664
      %2120 = vmatpush1.bf16.msra.mxu0 %v1663
      %2121 = vmatprep.subr.bf16.mxu0 %v1658
      %2122 = vmatpush1.bf16.msra.mxu0 %v1657
      %2123 = vmatprep.subr.bf16.mxu0 %v1652
      %2124 = vmatpush1.bf16.msra.mxu0 %v1651
      %2125 = vmatprep.subr.bf16.mxu0 %v1646
      %2126 = vmatpush1.bf16.msra.mxu0 %v1645
      %2127 = vmatprep.subr.bf16.mxu0 %v1640
      %2128 = vmatpush1.bf16.msra.mxu0 %v1639
      %2129 = vmatprep.subr.bf16.mxu0 %v1634
      %2130 = vmatpush1.bf16.msra.mxu0 %v1633
      %2131 = vmatprep.subr.bf16.mxu0 %v1628
      %2132 = vmatpush1.bf16.msra.mxu0 %v1627
      %2133 = vmatprep.subr.bf16.mxu0 %v1718
      %2134 = vmatpush2.bf16.msra.mxu0 %v1717
      %2135 = vmatprep.subr.bf16.mxu0 %v1712
      %2136 = vmatpush2.bf16.msra.mxu0 %v1711
      %2137 = vmatprep.subr.bf16.mxu0 %v1706
      %2138 = vmatpush2.bf16.msra.mxu0 %v1705
      %2139 = vmatprep.subr.bf16.mxu0 %v1700
      %2140 = vmatpush2.bf16.msra.mxu0 %v1699
      %2141 = vmatprep.subr.bf16.mxu0 %v1694
      %2142 = vmatpush2.bf16.msra.mxu0 %v1693
      %2143 = vmatprep.subr.bf16.mxu0 %v1688
      %2144 = vmatpush2.bf16.msra.mxu0 %v1687
      %2145 = vmatprep.subr.bf16.mxu0 %v1682
      %2146 = vmatpush2.bf16.msra.mxu0 %v1681
      %2147 = vmatprep.subr.bf16.mxu0 %v1676
      %2148 = vmatpush2.bf16.msra.mxu0 %v1675
      %2149 = vmatprep.mubr.bf16.mxu0 %v552
      %2150 = vmatmul.mubr.bf16.gmra.mxu0 %v551
      %v2151 = vpop.f32.mrf.mxu0
      %v2152 = vadd.f32 %v2099, %v2151
      %v2153 = vpop.f32.mrf.mxu0
      %v2154 = vadd.f32 %v2101, %v2153
      %v2155 = vpop.f32.mrf.mxu0
      %v2156 = vadd.f32 %v2103, %v2155
      %v2157 = vpop.f32.mrf.mxu0
      %v2158 = vadd.f32 %v2105, %v2157
      %2159 = vmatprep.mubr.bf16.mxu0 %v558
      %2160 = vmatmul.mubr.bf16.gmra.mxu0 %v557
      %v2161 = vpop.f32.mrf.mxu0
      %v2162 = vadd.f32 %v2109, %v2161
      %v2163 = vpop.f32.mrf.mxu0
      %v2164 = vadd.f32 %v2111, %v2163
      %v2165 = vpop.f32.mrf.mxu0
      %v2166 = vadd.f32 %v2113, %v2165
      %v2167 = vpop.f32.mrf.mxu0
      %v2168 = vadd.f32 %v2115, %v2167
      %2169 = vdwg.mxu0
      %2170 = vmatprep.subr.bf16.mxu0 %v1480
      %2171 = vmatpush1.bf16.msra.mxu0 %v1479
      %2172 = vmatprep.subr.bf16.mxu0 %v1474
      %2173 = vmatpush1.bf16.msra.mxu0 %v1473
      %2174 = vmatprep.subr.bf16.mxu0 %v1468
      %2175 = vmatpush1.bf16.msra.mxu0 %v1467
      %2176 = vmatprep.subr.bf16.mxu0 %v1462
      %2177 = vmatpush1.bf16.msra.mxu0 %v1461
      %2178 = vmatprep.subr.bf16.mxu0 %v1456
      %2179 = vmatpush1.bf16.msra.mxu0 %v1455
      %2180 = vmatprep.subr.bf16.mxu0 %v1450
      %2181 = vmatpush1.bf16.msra.mxu0 %v1449
      %2182 = vmatprep.subr.bf16.mxu0 %v1444
      %2183 = vmatpush1.bf16.msra.mxu0 %v1443
      %2184 = vmatprep.subr.bf16.mxu0 %v1438
      %2185 = vmatpush1.bf16.msra.mxu0 %v1437
      %2186 = vmatprep.subr.bf16.mxu0 %v1528
      %2187 = vmatpush2.bf16.msra.mxu0 %v1527
      %2188 = vmatprep.subr.bf16.mxu0 %v1522
      %2189 = vmatpush2.bf16.msra.mxu0 %v1521
      %2190 = vmatprep.subr.bf16.mxu0 %v1516
      %2191 = vmatpush2.bf16.msra.mxu0 %v1515
      %2192 = vmatprep.subr.bf16.mxu0 %v1510
      %2193 = vmatpush2.bf16.msra.mxu0 %v1509
      %2194 = vmatprep.subr.bf16.mxu0 %v1504
      %2195 = vmatpush2.bf16.msra.mxu0 %v1503
      %2196 = vmatprep.subr.bf16.mxu0 %v1498
      %2197 = vmatpush2.bf16.msra.mxu0 %v1497
      %2198 = vmatprep.subr.bf16.mxu0 %v1492
      %2199 = vmatpush2.bf16.msra.mxu0 %v1491
      %2200 = vmatprep.subr.bf16.mxu0 %v1486
      %2201 = vmatpush2.bf16.msra.mxu0 %v1485
      %2202 = vmatprep.mubr.bf16.mxu0 %v548
      %2203 = vmatmul.mubr.bf16.gmra.mxu0 %v547
      %v2204 = vpop.f32.mrf.mxu0
      %v2205 = vadd.f32 %v492, %v2204
      %v2206 = vpop.f32.mrf.mxu0
      %v2207 = vadd.f32 %v496, %v2206
      %v2208 = vpop.f32.mrf.mxu0
      %v2209 = vadd.f32 %v492, %v2208
      %v2210 = vpop.f32.mrf.mxu0
      %v2211 = vadd.f32 %v496, %v2210
      %2212 = vmatprep.mubr.bf16.mxu0 %v554
      %2213 = vmatmul.mubr.bf16.gmra.mxu0 %v553
      %v2214 = vpop.f32.mrf.mxu0
      %v2215 = vadd.f32 %v492, %v2214
      %v2216 = vpop.f32.mrf.mxu0
      %v2217 = vadd.f32 %v496, %v2216
      %v2218 = vpop.f32.mrf.mxu0
      %v2219 = vadd.f32 %v492, %v2218
      %v2220 = vpop.f32.mrf.mxu0
      %v2221 = vadd.f32 %v496, %v2220
      %2222 = vdwg.mxu0
      %2223 = vmatprep.subr.bf16.mxu0 %v1576
      %2224 = vmatpush1.bf16.msra.mxu0 %v1575
      %2225 = vmatprep.subr.bf16.mxu0 %v1570
      %2226 = vmatpush1.bf16.msra.mxu0 %v1569
      %2227 = vmatprep.subr.bf16.mxu0 %v1564
      %2228 = vmatpush1.bf16.msra.mxu0 %v1563
      %2229 = vmatprep.subr.bf16.mxu0 %v1558
      %2230 = vmatpush1.bf16.msra.mxu0 %v1557
      %2231 = vmatprep.subr.bf16.mxu0 %v1552
      %2232 = vmatpush1.bf16.msra.mxu0 %v1551
      %2233 = vmatprep.subr.bf16.mxu0 %v1546
      %2234 = vmatpush1.bf16.msra.mxu0 %v1545
      %2235 = vmatprep.subr.bf16.mxu0 %v1540
      %2236 = vmatpush1.bf16.msra.mxu0 %v1539
      %2237 = vmatprep.subr.bf16.mxu0 %v1534
      %2238 = vmatpush1.bf16.msra.mxu0 %v1533
      %2239 = vmatprep.subr.bf16.mxu0 %v1624
      %2240 = vmatpush2.bf16.msra.mxu0 %v1623
      %2241 = vmatprep.subr.bf16.mxu0 %v1618
      %2242 = vmatpush2.bf16.msra.mxu0 %v1617
      %2243 = vmatprep.subr.bf16.mxu0 %v1612
      %2244 = vmatpush2.bf16.msra.mxu0 %v1611
      %2245 = vmatprep.subr.bf16.mxu0 %v1606
      %2246 = vmatpush2.bf16.msra.mxu0 %v1605
      %2247 = vmatprep.subr.bf16.mxu0 %v1600
      %2248 = vmatpush2.bf16.msra.mxu0 %v1599
      %2249 = vmatprep.subr.bf16.mxu0 %v1594
      %2250 = vmatpush2.bf16.msra.mxu0 %v1593
      %2251 = vmatprep.subr.bf16.mxu0 %v1588
      %2252 = vmatpush2.bf16.msra.mxu0 %v1587
      %2253 = vmatprep.subr.bf16.mxu0 %v1582
      %2254 = vmatpush2.bf16.msra.mxu0 %v1581
      %2255 = vmatprep.mubr.bf16.mxu0 %v550
      %2256 = vmatmul.mubr.bf16.gmra.mxu0 %v549
      %v2257 = vpop.f32.mrf.mxu0
      %v2258 = vadd.f32 %v2205, %v2257
      %v2259 = vpop.f32.mrf.mxu0
      %v2260 = vadd.f32 %v2207, %v2259
      %v2261 = vpop.f32.mrf.mxu0
      %v2262 = vadd.f32 %v2209, %v2261
      %v2263 = vpop.f32.mrf.mxu0
      %v2264 = vadd.f32 %v2211, %v2263
      %2265 = vmatprep.mubr.bf16.mxu0 %v556
      %2266 = vmatmul.mubr.bf16.gmra.mxu0 %v555
      %v2267 = vpop.f32.mrf.mxu0
      %v2268 = vadd.f32 %v2215, %v2267
      %v2269 = vpop.f32.mrf.mxu0
      %v2270 = vadd.f32 %v2217, %v2269
      %v2271 = vpop.f32.mrf.mxu0
      %v2272 = vadd.f32 %v2219, %v2271
      %v2273 = vpop.f32.mrf.mxu0
      %v2274 = vadd.f32 %v2221, %v2273
      %2275 = vdwg.mxu0
      %2276 = vmatprep.subr.bf16.mxu0 %v1672
      %2277 = vmatpush1.bf16.msra.mxu0 %v1671
      %2278 = vmatprep.subr.bf16.mxu0 %v1666
      %2279 = vmatpush1.bf16.msra.mxu0 %v1665
      %2280 = vmatprep.subr.bf16.mxu0 %v1660
      %2281 = vmatpush1.bf16.msra.mxu0 %v1659
      %2282 = vmatprep.subr.bf16.mxu0 %v1654
      %2283 = vmatpush1.bf16.msra.mxu0 %v1653
      %2284 = vmatprep.subr.bf16.mxu0 %v1648
      %2285 = vmatpush1.bf16.msra.mxu0 %v1647
      %2286 = vmatprep.subr.bf16.mxu0 %v1642
      %2287 = vmatpush1.bf16.msra.mxu0 %v1641
      %2288 = vmatprep.subr.bf16.mxu0 %v1636
      %2289 = vmatpush1.bf16.msra.mxu0 %v1635
      %2290 = vmatprep.subr.bf16.mxu0 %v1630
      %2291 = vmatpush1.bf16.msra.mxu0 %v1629
      %2292 = vmatprep.subr.bf16.mxu0 %v1720
      %2293 = vmatpush2.bf16.msra.mxu0 %v1719
      %2294 = vmatprep.subr.bf16.mxu0 %v1714
      %2295 = vmatpush2.bf16.msra.mxu0 %v1713
      %2296 = vmatprep.subr.bf16.mxu0 %v1708
      %2297 = vmatpush2.bf16.msra.mxu0 %v1707
      %2298 = vmatprep.subr.bf16.mxu0 %v1702
      %2299 = vmatpush2.bf16.msra.mxu0 %v1701
      %2300 = vmatprep.subr.bf16.mxu0 %v1696
      %2301 = vmatpush2.bf16.msra.mxu0 %v1695
      %2302 = vmatprep.subr.bf16.mxu0 %v1690
      %2303 = vmatpush2.bf16.msra.mxu0 %v1689
      %2304 = vmatprep.subr.bf16.mxu0 %v1684
      %2305 = vmatpush2.bf16.msra.mxu0 %v1683
      %2306 = vmatprep.subr.bf16.mxu0 %v1678
      %2307 = vmatpush2.bf16.msra.mxu0 %v1677
      %2308 = vmatprep.mubr.bf16.mxu0 %v552
      %2309 = vmatmul.mubr.bf16.gmra.mxu0 %v551
      %v2310 = vpop.f32.mrf.mxu0
      %v2311 = vadd.f32 %v2258, %v2310
      %v2312 = vpop.f32.mrf.mxu0
      %v2313 = vadd.f32 %v2260, %v2312
      %v2314 = vpop.f32.mrf.mxu0
      %v2315 = vadd.f32 %v2262, %v2314
      %v2316 = vpop.f32.mrf.mxu0
      %v2317 = vadd.f32 %v2264, %v2316
      %2318 = vmatprep.mubr.bf16.mxu0 %v558
      %2319 = vmatmul.mubr.bf16.gmra.mxu0 %v557
      %v2320 = vpop.f32.mrf.mxu0
      %v2321 = vadd.f32 %v2268, %v2320
      %v2322 = vpop.f32.mrf.mxu0
      %v2323 = vadd.f32 %v2270, %v2322
      %v2324 = vpop.f32.mrf.mxu0
      %v2325 = vadd.f32 %v2272, %v2324
      %v2326 = vpop.f32.mrf.mxu0
      %v2327 = vadd.f32 %v2274, %v2326
      %2328 = vdwg.mxu0
      %2329 = vmatprep.subr.bf16.mxu0 %v1482
      %2330 = vmatpush1.bf16.msra.mxu0 %v1481
      %2331 = vmatprep.subr.bf16.mxu0 %v1476
      %2332 = vmatpush1.bf16.msra.mxu0 %v1475
      %2333 = vmatprep.subr.bf16.mxu0 %v1470
      %2334 = vmatpush1.bf16.msra.mxu0 %v1469
      %2335 = vmatprep.subr.bf16.mxu0 %v1464
      %2336 = vmatpush1.bf16.msra.mxu0 %v1463
      %2337 = vmatprep.subr.bf16.mxu0 %v1458
      %2338 = vmatpush1.bf16.msra.mxu0 %v1457
      %2339 = vmatprep.subr.bf16.mxu0 %v1452
      %2340 = vmatpush1.bf16.msra.mxu0 %v1451
      %2341 = vmatprep.subr.bf16.mxu0 %v1446
      %2342 = vmatpush1.bf16.msra.mxu0 %v1445
      %2343 = vmatprep.subr.bf16.mxu0 %v1440
      %2344 = vmatpush1.bf16.msra.mxu0 %v1439
      %2345 = vmatprep.subr.bf16.mxu0 %v1530
      %2346 = vmatpush2.bf16.msra.mxu0 %v1529
      %2347 = vmatprep.subr.bf16.mxu0 %v1524
      %2348 = vmatpush2.bf16.msra.mxu0 %v1523
      %2349 = vmatprep.subr.bf16.mxu0 %v1518
      %2350 = vmatpush2.bf16.msra.mxu0 %v1517
      %2351 = vmatprep.subr.bf16.mxu0 %v1512
      %2352 = vmatpush2.bf16.msra.mxu0 %v1511
      %2353 = vmatprep.subr.bf16.mxu0 %v1506
      %2354 = vmatpush2.bf16.msra.mxu0 %v1505
      %2355 = vmatprep.subr.bf16.mxu0 %v1500
      %2356 = vmatpush2.bf16.msra.mxu0 %v1499
      %2357 = vmatprep.subr.bf16.mxu0 %v1494
      %2358 = vmatpush2.bf16.msra.mxu0 %v1493
      %2359 = vmatprep.subr.bf16.mxu0 %v1488
      %2360 = vmatpush2.bf16.msra.mxu0 %v1487
      %2361 = vmatprep.mubr.bf16.mxu0 %v548
      %2362 = vmatmul.mubr.bf16.gmra.mxu0 %v547
      %v2363 = vpop.f32.mrf.mxu0
      %v2364 = vadd.f32 %v500, %v2363
      %v2365 = vpop.f32.mrf.mxu0
      %v2366 = vadd.f32 %v504, %v2365
      %v2367 = vpop.f32.mrf.mxu0
      %v2368 = vadd.f32 %v500, %v2367
      %v2369 = vpop.f32.mrf.mxu0
      %v2370 = vadd.f32 %v504, %v2369
      %2371 = vmatprep.mubr.bf16.mxu0 %v554
      %2372 = vmatmul.mubr.bf16.gmra.mxu0 %v553
      %v2373 = vpop.f32.mrf.mxu0
      %v2374 = vadd.f32 %v500, %v2373
      %v2375 = vpop.f32.mrf.mxu0
      %v2376 = vadd.f32 %v504, %v2375
      %v2377 = vpop.f32.mrf.mxu0
      %v2378 = vadd.f32 %v500, %v2377
      %v2379 = vpop.f32.mrf.mxu0
      %v2380 = vadd.f32 %v504, %v2379
      %2381 = vdwg.mxu0
      %2382 = vmatprep.subr.bf16.mxu0 %v1578
      %2383 = vmatpush1.bf16.msra.mxu0 %v1577
      %2384 = vmatprep.subr.bf16.mxu0 %v1572
      %2385 = vmatpush1.bf16.msra.mxu0 %v1571
      %2386 = vmatprep.subr.bf16.mxu0 %v1566
      %2387 = vmatpush1.bf16.msra.mxu0 %v1565
      %2388 = vmatprep.subr.bf16.mxu0 %v1560
      %2389 = vmatpush1.bf16.msra.mxu0 %v1559
      %2390 = vmatprep.subr.bf16.mxu0 %v1554
      %2391 = vmatpush1.bf16.msra.mxu0 %v1553
      %2392 = vmatprep.subr.bf16.mxu0 %v1548
      %2393 = vmatpush1.bf16.msra.mxu0 %v1547
      %2394 = vmatprep.subr.bf16.mxu0 %v1542
      %2395 = vmatpush1.bf16.msra.mxu0 %v1541
      %2396 = vmatprep.subr.bf16.mxu0 %v1536
      %2397 = vmatpush1.bf16.msra.mxu0 %v1535
      %2398 = vmatprep.subr.bf16.mxu0 %v1626
      %2399 = vmatpush2.bf16.msra.mxu0 %v1625
      %2400 = vmatprep.subr.bf16.mxu0 %v1620
      %2401 = vmatpush2.bf16.msra.mxu0 %v1619
      %2402 = vmatprep.subr.bf16.mxu0 %v1614
      %2403 = vmatpush2.bf16.msra.mxu0 %v1613
      %2404 = vmatprep.subr.bf16.mxu0 %v1608
      %2405 = vmatpush2.bf16.msra.mxu0 %v1607
      %2406 = vmatprep.subr.bf16.mxu0 %v1602
      %2407 = vmatpush2.bf16.msra.mxu0 %v1601
      %2408 = vmatprep.subr.bf16.mxu0 %v1596
      %2409 = vmatpush2.bf16.msra.mxu0 %v1595
      %2410 = vmatprep.subr.bf16.mxu0 %v1590
      %2411 = vmatpush2.bf16.msra.mxu0 %v1589
      %2412 = vmatprep.subr.bf16.mxu0 %v1584
      %2413 = vmatpush2.bf16.msra.mxu0 %v1583
      %2414 = vmatprep.mubr.bf16.mxu0 %v550
      %2415 = vmatmul.mubr.bf16.gmra.mxu0 %v549
      %v2416 = vpop.f32.mrf.mxu0
      %v2417 = vadd.f32 %v2364, %v2416
      %v2418 = vpop.f32.mrf.mxu0
      %v2419 = vadd.f32 %v2366, %v2418
      %v2420 = vpop.f32.mrf.mxu0
      %v2421 = vadd.f32 %v2368, %v2420
      %v2422 = vpop.f32.mrf.mxu0
      %v2423 = vadd.f32 %v2370, %v2422
      %2424 = vmatprep.mubr.bf16.mxu0 %v556
      %2425 = vmatmul.mubr.bf16.gmra.mxu0 %v555
      %v2426 = vpop.f32.mrf.mxu0
      %v2427 = vadd.f32 %v2374, %v2426
      %v2428 = vpop.f32.mrf.mxu0
      %v2429 = vadd.f32 %v2376, %v2428
      %v2430 = vpop.f32.mrf.mxu0
      %v2431 = vadd.f32 %v2378, %v2430
      %v2432 = vpop.f32.mrf.mxu0
      %v2433 = vadd.f32 %v2380, %v2432
      %2434 = vdwg.mxu0
      %2435 = vmatprep.subr.bf16.mxu0 %v1674
      %2436 = vmatpush1.bf16.msra.mxu0 %v1673
      %2437 = vmatprep.subr.bf16.mxu0 %v1668
      %2438 = vmatpush1.bf16.msra.mxu0 %v1667
      %2439 = vmatprep.subr.bf16.mxu0 %v1662
      %2440 = vmatpush1.bf16.msra.mxu0 %v1661
      %2441 = vmatprep.subr.bf16.mxu0 %v1656
      %2442 = vmatpush1.bf16.msra.mxu0 %v1655
      %2443 = vmatprep.subr.bf16.mxu0 %v1650
      %2444 = vmatpush1.bf16.msra.mxu0 %v1649
      %2445 = vmatprep.subr.bf16.mxu0 %v1644
      %2446 = vmatpush1.bf16.msra.mxu0 %v1643
      %2447 = vmatprep.subr.bf16.mxu0 %v1638
      %2448 = vmatpush1.bf16.msra.mxu0 %v1637
      %2449 = vmatprep.subr.bf16.mxu0 %v1632
      %2450 = vmatpush1.bf16.msra.mxu0 %v1631
      %2451 = vmatprep.subr.bf16.mxu0 %v1722
      %2452 = vmatpush2.bf16.msra.mxu0 %v1721
      %2453 = vmatprep.subr.bf16.mxu0 %v1716
      %2454 = vmatpush2.bf16.msra.mxu0 %v1715
      %2455 = vmatprep.subr.bf16.mxu0 %v1710
      %2456 = vmatpush2.bf16.msra.mxu0 %v1709
      %2457 = vmatprep.subr.bf16.mxu0 %v1704
      %2458 = vmatpush2.bf16.msra.mxu0 %v1703
      %2459 = vmatprep.subr.bf16.mxu0 %v1698
      %2460 = vmatpush2.bf16.msra.mxu0 %v1697
      %2461 = vmatprep.subr.bf16.mxu0 %v1692
      %2462 = vmatpush2.bf16.msra.mxu0 %v1691
      %2463 = vmatprep.subr.bf16.mxu0 %v1686
      %2464 = vmatpush2.bf16.msra.mxu0 %v1685
      %2465 = vmatprep.subr.bf16.mxu0 %v1680
      %2466 = vmatpush2.bf16.msra.mxu0 %v1679
      %2467 = vmatprep.mubr.bf16.mxu0 %v552
      %2468 = vmatmul.mubr.bf16.gmra.mxu0 %v551
      %v2469 = vpop.f32.mrf.mxu0
      %v2470 = vadd.f32 %v2417, %v2469
      %v2471 = vpop.f32.mrf.mxu0
      %v2472 = vadd.f32 %v2419, %v2471
      %v2473 = vpop.f32.mrf.mxu0
      %v2474 = vadd.f32 %v2421, %v2473
      %v2475 = vpop.f32.mrf.mxu0
      %v2476 = vadd.f32 %v2423, %v2475
      %2477 = vmatprep.mubr.bf16.mxu0 %v558
      %2478 = vmatmul.mubr.bf16.gmra.mxu0 %v557
      %v2479 = vpop.f32.mrf.mxu0
      %v2480 = vadd.f32 %v2427, %v2479
      %v2481 = vpop.f32.mrf.mxu0
      %v2482 = vadd.f32 %v2429, %v2481
      %v2483 = vpop.f32.mrf.mxu0
      %v2484 = vadd.f32 %v2431, %v2483
      %v2485 = vpop.f32.mrf.mxu0
      %v2486 = vadd.f32 %v2433, %v2485
      %2487 = vdwg.mxu0
      %v2488 = vtanh.pop %v2152
      %v2489 = vtanh.pop %v2154
      %v2490 = vtanh.pop %v2311
      %v2491 = vtanh.pop %v2313
      %v2492 = vtanh.pop %v2470
      %v2493 = vtanh.pop %v2472
      %v2494 = vtanh.pop %v2156
      %v2495 = vtanh.pop %v2158
      %v2496 = vtanh.pop %v2315
      %v2497 = vtanh.pop %v2317
      %v2498 = vtanh.pop %v2474
      %v2499 = vtanh.pop %v2476
      %v2500 = vtanh.pop %v2162
      %v2501 = vtanh.pop %v2164
      %v2502 = vtanh.pop %v2321
      %v2503 = vtanh.pop %v2323
      %v2504 = vtanh.pop %v2480
      %v2505 = vtanh.pop %v2482
      %v2506 = vtanh.pop %v2166
      %v2507 = vtanh.pop %v2168
      %v2508 = vtanh.pop %v2325
      %v2509 = vtanh.pop %v2327
      %v2510 = vtanh.pop %v2484
      %v2511 = vtanh.pop %v2486
      %2512 = vst [vmem:[%s177] sm:$0xff] %v2488
      %2513 = vst [vmem:[%s177 + $0x8] sm:$0xff] %v2489
      %2514 = vst [vmem:[%s177 + $0x10] sm:$0xff] %v2490
      %2515 = vst [vmem:[%s177 + $0x18] sm:$0xff] %v2491
      %2516 = vst [vmem:[%s177 + $0x20] sm:$0xff] %v2492
      %2517 = vst [vmem:[%s177 + $0x28] sm:$0xff] %v2493
      %2518 = vst [vmem:[%s177 + $0x30] sm:$0xff] %v2494
      %2519 = vst [vmem:[%s177 + $0x38] sm:$0xff] %v2495
      %2520 = vst [vmem:[%s177 + $0x40] sm:$0xff] %v2496
      %2521 = vst [vmem:[%s177 + $0x48] sm:$0xff] %v2497
      %2522 = vst [vmem:[%s177 + $0x50] sm:$0xff] %v2498
      %2523 = vst [vmem:[%s177 + $0x58] sm:$0xff] %v2499
      %2524 = vst [vmem:[%s177 + $0x60] sm:$0xff] %v2500
      %2525 = vst [vmem:[%s177 + $0x68] sm:$0xff] %v2501
      %2526 = vst [vmem:[%s177 + $0x70] sm:$0xff] %v2502
      %2527 = vst [vmem:[%s177 + $0x78] sm:$0xff] %v2503
      %2528 = vst [vmem:[%s177 + $0x80] sm:$0xff] %v2504
      %2529 = vst [vmem:[%s177 + $0x88] sm:$0xff] %v2505
      %2530 = vst [vmem:[%s177 + $0x90] sm:$0xff] %v2506
      %2531 = vst [vmem:[%s177 + $0x98] sm:$0xff] %v2507
      %2532 = vst [vmem:[%s177 + $0xa0] sm:$0xff] %v2508
      %2533 = vst [vmem:[%s177 + $0xa8] sm:$0xff] %v2509
      %2534 = vst [vmem:[%s177 + $0xb0] sm:$0xff] %v2510
      %2535 = vst [vmem:[%s177 + $0xb8] sm:$0xff] %v2511
      %s2536 = smul.u32 4, %s14
      %p2537 = scmp.lt.s32.totalorder %s2536, 7
      %s2538 = scalar_select %p2537, %s2536, 7
      %s2539 = smul.addr %s2538, 6
      %s2540 = smul.addr %s2539, 8
      %s2541 = scalar_lea.vmem %s3, %s2540
      // Predicated region
      $region33: #{co_model_forward.1} parent=31 // pred_check
        %p2542 = pneg %p100
      $region34: #{co_model_forward.1} parent=31 // pred_check_branch
        %2544 = sbr.rel (%p2542) target = $region36
      $region35: #{co_model_forward.1} parent=31 // pred_region
        %s2545 = smul.u32 4, %s14
      $region36: #{co_model_forward.1} parent=31 // pred_fallthru
        _
    $region32: #{co_model_forward.1} parent=5 // pred_fallthru
      _
    %p2546 = scmp.le.s32.totalorder 2, %s9
    // Predicated region
    $region37: #{co_model_forward.1} parent=5 // pred_check
      %p2547 = pneg %p2546
    $region38: #{co_model_forward.1} parent=5 // pred_check_branch
      %2549 = sbr.rel (%p2547) target = $region40
    $region39: #{co_model_forward.1} parent=5 // pred_region
      %s2550 = ssub.s32 %s9, 2
      // Predicated region
      $region41: #{co_model_forward.1} parent=39 // pred_check
        %p2551 = pneg %p106
      $region42: #{co_model_forward.1} parent=39 // pred_check_branch
        %2553 = sbr.rel (%p2551) target = $region44
      $region43: #{co_model_forward.1} parent=39 // pred_region
        %s2554 = smul.u32 4, %s15
        %p2555 = scmp.lt.s32.totalorder %s2554, 7
        %s2556 = scalar_select %p2555, %s2554, 7
        %s2557 = smul.addr %s2556, 6
        %s2558 = smul.addr %s2557, 8
        %s2559 = scalar_lea.vmem %s3, %s2558
      $region44: #{co_model_forward.1} parent=39 // pred_fallthru
        _
    $region40: #{co_model_forward.1} parent=5 // pred_fallthru
      _
  $region6: #{co_model_forward.1} parent=0 // loop_footer
    %s13 = sadd.s32 1, %s9
  $region7: #{co_model_forward.1} parent=0 // loop_footer_branch
    %8 = sbr.rel target = $region3
  $region8: #{co_model_forward.1} parent=0 // loop_exit
    _

</llo_original>
